<compile_context>
chip_gen: v6e
topology: v6e:2x2x1
jax: 0.10.0
libtpu: 0.0.40
codegen_flags: <defaults>
</compile_context>

<pallas_src>
import jax
import jax.numpy as jnp
from jax import lax
from jax.experimental import pallas as pl
from jax.experimental.pallas import tpu as pltpu

EXPANSION = 4
BN_EPS = 1e-5


# ---------------------------------------------------------------------------
# Kernel: one (batch image, TH-row tile) per grid step.
#   x_top / x_bot are 1-row halo blocks (clamped row index at the image edge).
#   h1_ref  : (TH+2, W, Cm)  bf16 scratch — conv1 output + halo rows.
#   tap_ref : (TH,  W, 9*Cm) bf16 scratch — conv2 im2col tap slab.
# ---------------------------------------------------------------------------
def _bottleneck_kernel(x_top_ref, x_mid_ref, x_bot_ref,
                       w1_ref, b1_ref, w2_ref, b2_ref, w3_ref, b3_ref,
                       o_ref, h1_ref, tap_ref):
    _, TH, W, Cin = x_mid_ref.shape
    Cm = w1_ref.shape[1]
    Cout = w3_ref.shape[1]
    i = pl.program_id(1)
    n_rows = pl.num_programs(1)

    # ---- conv1 (1x1) + BN1 + ReLU ------------------------------------------
    # Main tile rows go to h1 rows [1, TH+1).
    xm = x_mid_ref[...].reshape(TH * W, Cin)
    h1 = jnp.dot(xm.astype(jnp.bfloat16), w1_ref[...],
                 preferred_element_type=jnp.float32)
    h1 = jnp.maximum(h1 + b1_ref[...], 0.0)
    h1_ref[1:TH + 1] = h1.reshape(TH, W, Cm).astype(h1_ref.dtype)

    def _halo_row(x_row_ref):
        t = jnp.dot(x_row_ref[...].reshape(W, Cin).astype(jnp.bfloat16),
                    w1_ref[...], preferred_element_type=jnp.float32)
        t = jnp.maximum(t + b1_ref[...], 0.0)
        return t.astype(h1_ref.dtype).reshape(1, W, Cm)

    # conv2's padding=1: rows just outside the image are zero; otherwise the
    # halo row is the neighboring tile's row run through conv1+BN1+ReLU.
    @pl.when(i == 0)
    def _():
        h1_ref[0:1] = jnp.zeros((1, W, Cm), h1_ref.dtype)

    @pl.when(i > 0)
    def _():
        h1_ref[0:1] = _halo_row(x_top_ref)

    @pl.when(i == n_rows - 1)
    def _():
        h1_ref[TH + 1:TH + 2] = jnp.zeros((1, W, Cm), h1_ref.dtype)

    @pl.when(i < n_rows - 1)
    def _():
        h1_ref[TH + 1:TH + 2] = _halo_row(x_bot_ref)

    # ---- conv2 (3x3, stride 1, pad 1) as one K=9*Cm matmul ------------------
    # tap_ref column block t = kx*3 + ky holds input pixel (h + ky - 1,
    # w + kx - 1).  ky shifts are free first-axis slices of the halo'd h1
    # slab; kx shifts are folded into shifted static-slice stores (the single
    # zero-padded edge column is written separately) — no roll, no full-tensor
    # masks, only one shifted window live at a time.
    c3 = 3 * Cm
    # kx = 1 : input column w
    tap_ref[:, :, c3:2 * c3] = jnp.concatenate(
        [h1_ref[ky:ky + TH, :, :] for ky in range(3)], axis=-1)
    # kx = 0 : input column w-1  (output column 0 sees zero padding)
    tap_ref[:, 0:1, 0:c3] = jnp.zeros((TH, 1, c3), h1_ref.dtype)
    tap_ref[:, 1:W, 0:c3] = jnp.concatenate(
        [h1_ref[ky:ky + TH, 0:W - 1, :] for ky in range(3)], axis=-1)
    # kx = 2 : input column w+1  (output column W-1 sees zero padding)
    tap_ref[:, W - 1:W, 2 * c3:3 * c3] = jnp.zeros((TH, 1, c3), h1_ref.dtype)
    tap_ref[:, 0:W - 1, 2 * c3:3 * c3] = jnp.concatenate(
        [h1_ref[ky:ky + TH, 1:W, :] for ky in range(3)], axis=-1)

    taps = tap_ref[...].reshape(TH * W, 9 * Cm)
    h2 = jnp.dot(taps, w2_ref[...], preferred_element_type=jnp.float32)
    h2 = jnp.maximum(h2 + b2_ref[...], 0.0)                     # (TH*W, Cm)

    # ---- conv3 (1x1) + BN3 + residual add + ReLU ----------------------------
    h3 = jnp.dot(h2.astype(jnp.bfloat16), w3_ref[...],
                 preferred_element_type=jnp.float32) + b3_ref[...]
    res = x_mid_ref[...].reshape(TH * W, Cin).astype(jnp.float32)
    out = jnp.maximum(h3 + res, 0.0)
    o_ref[...] = out.reshape(1, TH, W, Cout).astype(o_ref.dtype)


# ---------------------------------------------------------------------------
# Parameter folding, tiling heuristics, pallas_call wrapper
# ---------------------------------------------------------------------------
def _fold_bn(gamma, beta, mean, var, conv_bias):
    scale = gamma / jnp.sqrt(var + BN_EPS)            # (C,)
    shift = beta + (conv_bias - mean) * scale         # (C,)
    return scale, shift


def _vmem_limit_bytes():
    """Generation-aware scoped-VMEM limit (leave ~25% headroom)."""
    cap = None
    try:
        info = pltpu.get_tpu_info()
        cap = int(getattr(info, "vmem_capacity_bytes", 0)) or None
    except Exception:
        cap = None
    if cap is None:
        cap = 64 * 1024 * 1024            # conservative (v7x physical VMEM)
    return max(32 * 1024 * 1024, min(cap * 3 // 4, 100 * 1024 * 1024))


def _pick_row_tile(H, W, Cin, Cm, Cout, x_bytes, budget, min_row_steps):
    """Largest divisor of H whose per-step VMEM footprint fits the budget and
    leaves at least `min_row_steps` grid steps along the row axis."""
    best = 1
    for th in range(1, H + 1):
        if H % th != 0 or (H // th) < min_row_steps:
            continue
        est = (2 * th * W * Cin * x_bytes            # x_mid (double-buffered)
               + 2 * th * W * Cout * x_bytes         # out   (double-buffered)
               + 4 * W * Cin * x_bytes               # halo row blocks
               + (th + 2) * W * Cm * 2               # h1 scratch (bf16)
               + th * W * 9 * Cm * 2                 # conv2 tap scratch (bf16)
               + th * W * (2 * Cm + 2 * Cout) * 4)   # f32 temporaries headroom
        if est <= budget:
            best = max(best, th)
    return best


def bottleneck_forward_nhwc(x, params, *, row_tile=None):
    """x: (N, H, W, Cin), float32 or bfloat16, channels-last."""
    assert x.dtype in (jnp.float32, jnp.bfloat16)
    N, H, W, Cin = x.shape
    assert W >= 2, "kernel assumes image width >= 2"

    w1_pt, b1_pt = params["conv1_w"], params["conv1_b"]
    w2_pt, b2_pt = params["conv2_w"], params["conv2_b"]
    w3_pt, b3_pt = params["conv3_w"], params["conv3_b"]
    Cm, Cout = w1_pt.shape[0], w3_pt.shape[0]
    assert Cout == Cin, \
        "identity residual requires in_channels == out_channels * expansion"

    s1, sh1 = _fold_bn(params["bn1_g"], params["bn1_b"], params["bn1_m"],
                       params["bn1_v"], b1_pt)
    s2, sh2 = _fold_bn(params["bn2_g"], params["bn2_b"], params["bn2_m"],
                       params["bn2_v"], b2_pt)
    s3, sh3 = _fold_bn(params["bn3_g"], params["bn3_b"], params["bn3_m"],
                       params["bn3_v"], b3_pt)

    # Fold BN scales into the conv weights (host/trace-time, free).
    w1 = (jnp.transpose(w1_pt[:, :, 0, 0], (1, 0)) * s1[None, :]).astype(jnp.bfloat16)
    # conv2 weight reshaped to (9*Cm, Cm): row block t = kx*3 + ky (matches the
    # kernel's tap-slab column ordering).
    w2 = jnp.concatenate(
        [jnp.transpose(w2_pt[:, :, ky, kx], (1, 0)) * s2[None, :]
         for kx in range(3) for ky in range(3)], axis=0).astype(jnp.bfloat16)
    w3 = (jnp.transpose(w3_pt[:, :, 0, 0], (1, 0)) * s3[None, :]).astype(jnp.bfloat16)
    b1 = sh1.reshape(1, -1).astype(jnp.float32)
    b2 = sh2.reshape(1, -1).astype(jnp.float32)
    b3 = sh3.reshape(1, -1).astype(jnp.float32)

    vmem_limit = _vmem_limit_bytes()
    weight_bytes = (w1.size + w2.size + w3.size) * 2 + (b1.size + b2.size + b3.size) * 4
    budget = int(vmem_limit * 0.6) - weight_bytes
    # Keep >= 2 row-tile steps when N == 1 so a megacore chip still gets two
    # parallel grid steps; with N >= 2 the batch axis already provides them.
    min_row_steps = 1 if N >= 2 else min(2, H)
    TH = _pick_row_tile(H, W, Cin, Cm, Cout, x.dtype.itemsize, budget, min_row_steps)
    if row_tile is not None:                     # explicit override (testing)
        TH = max(d for d in range(1, H + 1) if H % d == 0 and d <= row_tile)
    grid = (N, H // TH)

    # Weights / shifts: whole-array VMEM-resident, not pipelined (no double
    # buffering of the resident parameters).
    resident = pl.BlockSpec(memory_space=pltpu.MemorySpace.VMEM)

    x_mid_spec = pl.BlockSpec((1, TH, W, Cin), lambda n, i: (n, i, 0, 0))
    # 1-row halo blocks: block size 1 along H => block index == row index.
    # Rows are clamped at the image edges; the clamped value is never used
    # because the kernel zeroes those halo rows instead.
    x_top_spec = pl.BlockSpec((1, 1, W, Cin),
                              lambda n, i: (n, jnp.maximum(i * TH - 1, 0), 0, 0))
    x_bot_spec = pl.BlockSpec((1, 1, W, Cin),
                              lambda n, i: (n, jnp.minimum(i * TH + TH, H - 1), 0, 0))
    out_spec = pl.BlockSpec((1, TH, W, Cout), lambda n, i: (n, i, 0, 0))

    return pl.pallas_call(
        _bottleneck_kernel,
        out_shape=jax.ShapeDtypeStruct((N, H, W, Cout), x.dtype),
        grid=grid,
        in_specs=[x_top_spec, x_mid_spec, x_bot_spec,
                  resident, resident, resident, resident, resident, resident],
        out_specs=out_spec,
        scratch_shapes=[pltpu.VMEM((TH + 2, W, Cm), jnp.bfloat16),
                        pltpu.VMEM((TH, W, 9 * Cm), jnp.bfloat16)],
        compiler_params=pltpu.CompilerParams(
            dimension_semantics=("parallel", "parallel"),
            vmem_limit_bytes=vmem_limit),
    )(x, x, x, w1, b1, w2, b2, w3, b3)


def bottleneck_forward(x_nchw, params, *, row_tile=None):
    """PyTorch-layout wrapper. NOTE: each transpose is a full HBM round trip
    outside the kernel — use bottleneck_forward_nhwc in NHWC pipelines."""
    x = jnp.transpose(x_nchw, (0, 2, 3, 1))
    y = bottleneck_forward_nhwc(x, params, row_tile=row_tile)
    return jnp.transpose(y, (0, 3, 1, 2))


# ---------------------------------------------------------------------------
# Pure-JAX reference (same eval-mode semantics) for the correctness check
# ---------------------------------------------------------------------------
def _reference(x_nchw, params):
    x = jnp.transpose(x_nchw, (0, 2, 3, 1)).astype(jnp.float32)
    dn = ("NHWC", "HWIO", "NHWC")

    def conv(inp, w_pt, b_pt, pad):
        w = jnp.transpose(w_pt, (2, 3, 1, 0))                      # HWIO
        y = lax.conv_general_dilated(inp, w, (1, 1), pad, dimension_numbers=dn)
        return y + b_pt.reshape(1, 1, 1, -1)

    def bn(inp, g, b, m, v):
        return (inp - m) / jnp.sqrt(v + BN_EPS) * g + b

    identity = x
    h = jax.nn.relu(bn(conv(x, params["conv1_w"], params["conv1_b"],
                            [(0, 0), (0, 0)]),
                       params["bn1_g"], params["bn1_b"], params["bn1_m"], params["bn1_v"]))
    h = jax.nn.relu(bn(conv(h, params["conv2_w"], params["conv2_b"],
                            [(1, 1), (1, 1)]),
                       params["bn2_g"], params["bn2_b"], params["bn2_m"], params["bn2_v"]))
    h = bn(conv(h, params["conv3_w"], params["conv3_b"], [(0, 0), (0, 0)]),
           params["bn3_g"], params["bn3_b"], params["bn3_m"], params["bn3_v"])
    h = jax.nn.relu(h + identity)
    return jnp.transpose(h, (0, 3, 1, 2))


def _init_params(key, in_channels, out_channels):
    ks = jax.random.split(key, 16)
    Cm, Cout = out_channels, out_channels * EXPANSION

    def w(k, shape, fan_in):
        return (jax.random.normal(k, shape, jnp.float32) / jnp.sqrt(fan_in)) * 0.5

    return {
        "conv1_w": w(ks[0], (Cm, in_channels, 1, 1), in_channels),
        "conv1_b": 0.1 * jax.random.normal(ks[1], (Cm,), jnp.float32),
        "conv2_w": w(ks[2], (Cm, Cm, 3, 3), Cm * 9),
        "conv2_b": 0.1 * jax.random.normal(ks[3], (Cm,), jnp.float32),
        "conv3_w": w(ks[4], (Cout, Cm, 1, 1), Cm),
        "conv3_b": 0.1 * jax.random.normal(ks[5], (Cout,), jnp.float32),
        "bn1_g": 1.0 + 0.1 * jax.random.normal(ks[6], (Cm,), jnp.float32),
        "bn1_b": 0.1 * jax.random.normal(ks[7], (Cm,), jnp.float32),
        "bn1_m": 0.1 * jax.random.normal(ks[8], (Cm,), jnp.float32),
        "bn1_v": 0.5 + jnp.abs(jax.random.normal(ks[9], (Cm,), jnp.float32)),
        "bn2_g": 1.0 + 0.1 * jax.random.normal(ks[10], (Cm,), jnp.float32),
        "bn2_b": 0.1 * jax.random.normal(ks[11], (Cm,), jnp.float32),
        "bn2_m": 0.1 * jax.random.normal(ks[12], (Cm,), jnp.float32),
        "bn2_v": 0.5 + jnp.abs(jax.random.normal(ks[13], (Cm,), jnp.float32)),
        "bn3_g": 1.0 + 0.1 * jax.random.normal(ks[14], (Cout,), jnp.float32),
        "bn3_b": 0.1 * jax.random.normal(ks[15], (Cout,), jnp.float32),
        "bn3_m": jnp.zeros((Cout,), jnp.float32),
        "bn3_v": jnp.ones((Cout,), jnp.float32),
    }


if __name__ == "__main__":
    key = jax.random.PRNGKey(0)
    k_x, k_p = jax.random.split(key)

    # Bottleneck(in_channels=16, out_channels=4, i_downsample=None, stride=1)
    N, Cin, H, W = 2, 16, 8, 8
    out_channels = 4                      # Cout = out_channels * 4 = 16 == Cin

    x = jax.random.normal(k_x, (N, Cin, H, W), jnp.float32)
    params = _init_params(k_p, Cin, out_channels)
    ref = _reference(x, params)

    # 1) Auto-sized row tile (whole image per grid step at these shapes):
    #    exercises the boundary-zeroed halo path.
    out = jax.block_until_ready(bottleneck_forward(x, params))
    assert out.shape == (N, Cin, H, W)
    # bf16 matmul inputs (BN scale folded into bf16 weights) with f32 accumulation.
    assert jnp.allclose(out, ref, rtol=5e-2, atol=5e-2), \
        f"max abs err = {jnp.max(jnp.abs(out - ref))}"

    # 2) Forced small row tiles (grid (N, 2)): exercises the halo exchange
    #    between row tiles.
    out2 = jax.block_until_ready(bottleneck_forward(x, params, row_tile=4))
    assert jnp.allclose(out2, ref, rtol=5e-2, atol=5e-2), \
        f"max abs err = {jnp.max(jnp.abs(out2 - ref))}"

    print("KERNEL_OK")
</pallas_src>

<mosaic_0001>
module attributes {stable_mosaic.version = 11 : i64} {
  func.func @_bottleneck_kernel(%arg0: i32, %arg1: i32, %arg2: memref<1x1x8x16xf32, #tpu.memory_space<vmem>>, %arg3: memref<1x8x8x16xf32, #tpu.memory_space<vmem>>, %arg4: memref<1x1x8x16xf32, #tpu.memory_space<vmem>>, %arg5: memref<16x4xbf16, #tpu.memory_space<vmem>>, %arg6: memref<1x4xf32, #tpu.memory_space<vmem>>, %arg7: memref<36x4xbf16, #tpu.memory_space<vmem>>, %arg8: memref<1x4xf32, #tpu.memory_space<vmem>>, %arg9: memref<4x16xbf16, #tpu.memory_space<vmem>>, %arg10: memref<1x16xf32, #tpu.memory_space<vmem>>, %arg11: memref<1x8x8x16xf32, #tpu.memory_space<vmem>>, %arg12: memref<10x8x4xbf16, #tpu.memory_space<vmem>>, %arg13: memref<8x8x36xbf16, #tpu.memory_space<vmem>>) attributes {dimension_semantics = [#tpu.dimension_semantics<parallel>, #tpu.dimension_semantics<parallel>], iteration_bounds = array<i64: 2, 1>, scalar_prefetch = 0 : i64, scratch_operands = 2 : i64, tpu.core_type = #tpu.core_type<tc>, window_params = [{transform_indices = @transform_0, window_bounds = array<i64: 1, 1, 8, 16>}, {transform_indices = @transform_1, window_bounds = array<i64: 1, 8, 8, 16>}, {transform_indices = @transform_2, window_bounds = array<i64: 1, 1, 8, 16>}, {pipeline_mode = #tpu.pipeline_mode<synchronous>, transform_indices = @transform_3, window_bounds = array<i64: 16, 4>}, {pipeline_mode = #tpu.pipeline_mode<synchronous>, transform_indices = @transform_4, window_bounds = array<i64: 1, 4>}, {pipeline_mode = #tpu.pipeline_mode<synchronous>, transform_indices = @transform_5, window_bounds = array<i64: 36, 4>}, {pipeline_mode = #tpu.pipeline_mode<synchronous>, transform_indices = @transform_6, window_bounds = array<i64: 1, 4>}, {pipeline_mode = #tpu.pipeline_mode<synchronous>, transform_indices = @transform_7, window_bounds = array<i64: 4, 16>}, {pipeline_mode = #tpu.pipeline_mode<synchronous>, transform_indices = @transform_8, window_bounds = array<i64: 1, 16>}, {transform_indices = @transform_9, window_bounds = array<i64: 1, 8, 8, 16>}]} {
    %c0 = arith.constant 0 : index
    %c0_0 = arith.constant 0 : index
    %c0_1 = arith.constant 0 : index
    %c0_2 = arith.constant 0 : index
    %0 = vector.load %arg3[%c0, %c0_0, %c0_1, %c0_2] : memref<1x8x8x16xf32, #tpu.memory_space<vmem>>, vector<1x8x8x16xf32>
    %1 = vector.shape_cast %0 : vector<1x8x8x16xf32> to vector<64x16xf32>
    %2 = arith.truncf %1 : vector<64x16xf32> to vector<64x16xbf16>
    %c0_3 = arith.constant 0 : index
    %c0_4 = arith.constant 0 : index
    %3 = vector.load %arg5[%c0_3, %c0_4] : memref<16x4xbf16, #tpu.memory_space<vmem>>, vector<16x4xbf16>
    %cst = arith.constant dense<0.000000e+00> : vector<64x4xf32>
    %4 = tpu.matmul %2, %3, %cst {dimension_numbers = #tpu.dot_dimension_numbers<[1], [0], [0], [1], [0, 0, 1, 1], [], []>} : vector<64x16xbf16>, vector<16x4xbf16>, vector<64x4xf32> -> vector<64x4xf32>
    %c0_5 = arith.constant 0 : index
    %c0_6 = arith.constant 0 : index
    %5 = vector.load %arg6[%c0_5, %c0_6] : memref<1x4xf32, #tpu.memory_space<vmem>>, vector<1x4xf32>
    %6 = vector.broadcast %5 : vector<1x4xf32> to vector<64x4xf32>
    %7 = arith.addf %4, %6 : vector<64x4xf32>
    %cst_7 = arith.constant 0.000000e+00 : f32
    %8 = vector.broadcast %cst_7 : f32 to vector<64x4xf32>
    %9 = arith.maximumf %7, %8 : vector<64x4xf32>
    %10 = vector.shape_cast %9 : vector<64x4xf32> to vector<8x8x4xf32>
    %11 = arith.truncf %10 : vector<8x8x4xf32> to vector<8x8x4xbf16>
    %c1 = arith.constant 1 : index
    %c0_8 = arith.constant 0 : index
    %c0_9 = arith.constant 0 : index
    %12 = vector.load %arg12[%c1, %c0_8, %c0_9] : memref<10x8x4xbf16, #tpu.memory_space<vmem>>, vector<8x8x4xbf16>
    tpu.vector_store %arg12[%c1, %c0_8, %c0_9], %11 {strides = array<i32>} : memref<10x8x4xbf16, #tpu.memory_space<vmem>>, vector<8x8x4xbf16>,
    %c0_i32 = arith.constant 0 : i32
    %13 = arith.cmpi eq, %arg1, %c0_i32 : i32
    %14 = arith.extui %13 : i1 to i32
    %c0_i32_10 = arith.constant 0 : i32
    %15 = arith.cmpi ne, %14, %c0_i32_10 : i32
    scf.if %15 {
      %cst_80 = arith.constant 0.000000e+00 : bf16
      %66 = vector.broadcast %cst_80 : bf16 to vector<1x8x4xbf16>
      %c0_81 = arith.constant 0 : index
      %c0_82 = arith.constant 0 : index
      %c0_83 = arith.constant 0 : index
      %67 = vector.load %arg12[%c0_81, %c0_82, %c0_83] : memref<10x8x4xbf16, #tpu.memory_space<vmem>>, vector<1x8x4xbf16>
      tpu.vector_store %arg12[%c0_81, %c0_82, %c0_83], %66 {strides = array<i32>} : memref<10x8x4xbf16, #tpu.memory_space<vmem>>, vector<1x8x4xbf16>,
    } else {
    }
    %c0_i32_11 = arith.constant 0 : i32
    %16 = arith.cmpi sgt, %arg1, %c0_i32_11 : i32
    %17 = arith.extui %16 : i1 to i32
    %c0_i32_12 = arith.constant 0 : i32
    %18 = arith.cmpi ne, %17, %c0_i32_12 : i32
    scf.if %18 {
      %c0_80 = arith.constant 0 : index
      %c0_81 = arith.constant 0 : index
      %c0_82 = arith.constant 0 : index
      %c0_83 = arith.constant 0 : index
      %66 = vector.load %arg2[%c0_80, %c0_81, %c0_82, %c0_83] : memref<1x1x8x16xf32, #tpu.memory_space<vmem>>, vector<1x1x8x16xf32>
      %67 = vector.shape_cast %66 : vector<1x1x8x16xf32> to vector<8x16xf32>
      %68 = arith.truncf %67 : vector<8x16xf32> to vector<8x16xbf16>
      %c0_84 = arith.constant 0 : index
      %c0_85 = arith.constant 0 : index
      %69 = vector.load %arg5[%c0_84, %c0_85] : memref<16x4xbf16, #tpu.memory_space<vmem>>, vector<16x4xbf16>
      %cst_86 = arith.constant dense<0.000000e+00> : vector<8x4xf32>
      %70 = tpu.matmul %68, %69, %cst_86 {dimension_numbers = #tpu.dot_dimension_numbers<[1], [0], [0], [1], [0, 0, 1, 1], [], []>} : vector<8x16xbf16>, vector<16x4xbf16>, vector<8x4xf32> -> vector<8x4xf32>
      %c0_87 = arith.constant 0 : index
      %c0_88 = arith.constant 0 : index
      %71 = vector.load %arg6[%c0_87, %c0_88] : memref<1x4xf32, #tpu.memory_space<vmem>>, vector<1x4xf32>
      %72 = vector.broadcast %71 : vector<1x4xf32> to vector<8x4xf32>
      %73 = arith.addf %70, %72 : vector<8x4xf32>
      %cst_89 = arith.constant 0.000000e+00 : f32
      %74 = vector.broadcast %cst_89 : f32 to vector<8x4xf32>
      %75 = arith.maximumf %73, %74 : vector<8x4xf32>
      %76 = arith.truncf %75 : vector<8x4xf32> to vector<8x4xbf16>
      %77 = vector.shape_cast %76 : vector<8x4xbf16> to vector<1x8x4xbf16>
      %c0_90 = arith.constant 0 : index
      %c0_91 = arith.constant 0 : index
      %c0_92 = arith.constant 0 : index
      %78 = vector.load %arg12[%c0_90, %c0_91, %c0_92] : memref<10x8x4xbf16, #tpu.memory_space<vmem>>, vector<1x8x4xbf16>
      tpu.vector_store %arg12[%c0_90, %c0_91, %c0_92], %77 {strides = array<i32>} : memref<10x8x4xbf16, #tpu.memory_space<vmem>>, vector<1x8x4xbf16>,
    } else {
    }
    %c0_i32_13 = arith.constant 0 : i32
    %19 = arith.cmpi eq, %arg1, %c0_i32_13 : i32
    %20 = arith.extui %19 : i1 to i32
    %c0_i32_14 = arith.constant 0 : i32
    %21 = arith.cmpi ne, %20, %c0_i32_14 : i32
    scf.if %21 {
      %cst_80 = arith.constant 0.000000e+00 : bf16
      %66 = vector.broadcast %cst_80 : bf16 to vector<1x8x4xbf16>
      %c9 = arith.constant 9 : index
      %c0_81 = arith.constant 0 : index
      %c0_82 = arith.constant 0 : index
      %67 = vector.load %arg12[%c9, %c0_81, %c0_82] : memref<10x8x4xbf16, #tpu.memory_space<vmem>>, vector<1x8x4xbf16>
      tpu.vector_store %arg12[%c9, %c0_81, %c0_82], %66 {strides = array<i32>} : memref<10x8x4xbf16, #tpu.memory_space<vmem>>, vector<1x8x4xbf16>,
    } else {
    }
    %c0_i32_15 = arith.constant 0 : i32
    %22 = arith.cmpi slt, %arg1, %c0_i32_15 : i32
    %23 = arith.extui %22 : i1 to i32
    %c0_i32_16 = arith.constant 0 : i32
    %24 = arith.cmpi ne, %23, %c0_i32_16 : i32
    scf.if %24 {
      %c0_80 = arith.constant 0 : index
      %c0_81 = arith.constant 0 : index
      %c0_82 = arith.constant 0 : index
      %c0_83 = arith.constant 0 : index
      %66 = vector.load %arg4[%c0_80, %c0_81, %c0_82, %c0_83] : memref<1x1x8x16xf32, #tpu.memory_space<vmem>>, vector<1x1x8x16xf32>
      %67 = vector.shape_cast %66 : vector<1x1x8x16xf32> to vector<8x16xf32>
      %68 = arith.truncf %67 : vector<8x16xf32> to vector<8x16xbf16>
      %c0_84 = arith.constant 0 : index
      %c0_85 = arith.constant 0 : index
      %69 = vector.load %arg5[%c0_84, %c0_85] : memref<16x4xbf16, #tpu.memory_space<vmem>>, vector<16x4xbf16>
      %cst_86 = arith.constant dense<0.000000e+00> : vector<8x4xf32>
      %70 = tpu.matmul %68, %69, %cst_86 {dimension_numbers = #tpu.dot_dimension_numbers<[1], [0], [0], [1], [0, 0, 1, 1], [], []>} : vector<8x16xbf16>, vector<16x4xbf16>, vector<8x4xf32> -> vector<8x4xf32>
      %c0_87 = arith.constant 0 : index
      %c0_88 = arith.constant 0 : index
      %71 = vector.load %arg6[%c0_87, %c0_88] : memref<1x4xf32, #tpu.memory_space<vmem>>, vector<1x4xf32>
      %72 = vector.broadcast %71 : vector<1x4xf32> to vector<8x4xf32>
      %73 = arith.addf %70, %72 : vector<8x4xf32>
      %cst_89 = arith.constant 0.000000e+00 : f32
      %74 = vector.broadcast %cst_89 : f32 to vector<8x4xf32>
      %75 = arith.maximumf %73, %74 : vector<8x4xf32>
      %76 = arith.truncf %75 : vector<8x4xf32> to vector<8x4xbf16>
      %77 = vector.shape_cast %76 : vector<8x4xbf16> to vector<1x8x4xbf16>
      %c9 = arith.constant 9 : index
      %c0_90 = arith.constant 0 : index
      %c0_91 = arith.constant 0 : index
      %78 = vector.load %arg12[%c9, %c0_90, %c0_91] : memref<10x8x4xbf16, #tpu.memory_space<vmem>>, vector<1x8x4xbf16>
      tpu.vector_store %arg12[%c9, %c0_90, %c0_91], %77 {strides = array<i32>} : memref<10x8x4xbf16, #tpu.memory_space<vmem>>, vector<1x8x4xbf16>,
    } else {
    }
    %c0_17 = arith.constant 0 : index
    %c0_18 = arith.constant 0 : index
    %c0_19 = arith.constant 0 : index
    %25 = vector.load %arg12[%c0_17, %c0_18, %c0_19] : memref<10x8x4xbf16, #tpu.memory_space<vmem>>, vector<8x8x4xbf16>
    %c1_20 = arith.constant 1 : index
    %c0_21 = arith.constant 0 : index
    %c0_22 = arith.constant 0 : index
    %26 = vector.load %arg12[%c1_20, %c0_21, %c0_22] : memref<10x8x4xbf16, #tpu.memory_space<vmem>>, vector<8x8x4xbf16>
    %c2 = arith.constant 2 : index
    %c0_23 = arith.constant 0 : index
    %c0_24 = arith.constant 0 : index
    %27 = vector.load %arg12[%c2, %c0_23, %c0_24] : memref<10x8x4xbf16, #tpu.memory_space<vmem>>, vector<8x8x4xbf16>
    %28 = tpu.concatenate %25, %26, %27 in 2 : vector<8x8x4xbf16>, vector<8x8x4xbf16>, vector<8x8x4xbf16> -> vector<8x8x12xbf16>
    %c0_25 = arith.constant 0 : index
    %c0_26 = arith.constant 0 : index
    %c12 = arith.constant 12 : index
    %29 = vector.load %arg13[%c0_25, %c0_26, %c12] : memref<8x8x36xbf16, #tpu.memory_space<vmem>>, vector<8x8x12xbf16>
    tpu.vector_store %arg13[%c0_25, %c0_26, %c12], %28 {strides = array<i32>} : memref<8x8x36xbf16, #tpu.memory_space<vmem>>, vector<8x8x12xbf16>,
    %cst_27 = arith.constant 0.000000e+00 : bf16
    %30 = vector.broadcast %cst_27 : bf16 to vector<8x1x12xbf16>
    %c0_28 = arith.constant 0 : index
    %c0_29 = arith.constant 0 : index
    %c0_30 = arith.constant 0 : index
    %31 = vector.load %arg13[%c0_28, %c0_29, %c0_30] : memref<8x8x36xbf16, #tpu.memory_space<vmem>>, vector<8x1x12xbf16>
    tpu.vector_store %arg13[%c0_28, %c0_29, %c0_30], %30 {strides = array<i32>} : memref<8x8x36xbf16, #tpu.memory_space<vmem>>, vector<8x1x12xbf16>,
    %c0_31 = arith.constant 0 : index
    %c0_32 = arith.constant 0 : index
    %c0_33 = arith.constant 0 : index
    %32 = vector.load %arg12[%c0_31, %c0_32, %c0_33] : memref<10x8x4xbf16, #tpu.memory_space<vmem>>, vector<8x7x4xbf16>
    %c1_34 = arith.constant 1 : index
    %c0_35 = arith.constant 0 : index
    %c0_36 = arith.constant 0 : index
    %33 = vector.load %arg12[%c1_34, %c0_35, %c0_36] : memref<10x8x4xbf16, #tpu.memory_space<vmem>>, vector<8x7x4xbf16>
    %c2_37 = arith.constant 2 : index
    %c0_38 = arith.constant 0 : index
    %c0_39 = arith.constant 0 : index
    %34 = vector.load %arg12[%c2_37, %c0_38, %c0_39] : memref<10x8x4xbf16, #tpu.memory_space<vmem>>, vector<8x7x4xbf16>
    %35 = tpu.concatenate %32, %33, %34 in 2 : vector<8x7x4xbf16>, vector<8x7x4xbf16>, vector<8x7x4xbf16> -> vector<8x7x12xbf16>
    %c0_40 = arith.constant 0 : index
    %c1_41 = arith.constant 1 : index
    %c0_42 = arith.constant 0 : index
    %36 = vector.load %arg13[%c0_40, %c1_41, %c0_42] : memref<8x8x36xbf16, #tpu.memory_space<vmem>>, vector<8x7x12xbf16>
    tpu.vector_store %arg13[%c0_40, %c1_41, %c0_42], %35 {strides = array<i32>} : memref<8x8x36xbf16, #tpu.memory_space<vmem>>, vector<8x7x12xbf16>,
    %cst_43 = arith.constant 0.000000e+00 : bf16
    %37 = vector.broadcast %cst_43 : bf16 to vector<8x1x12xbf16>
    %c0_44 = arith.constant 0 : index
    %c7 = arith.constant 7 : index
    %c24 = arith.constant 24 : index
    %38 = vector.load %arg13[%c0_44, %c7, %c24] : memref<8x8x36xbf16, #tpu.memory_space<vmem>>, vector<8x1x12xbf16>
    tpu.vector_store %arg13[%c0_44, %c7, %c24], %37 {strides = array<i32>} : memref<8x8x36xbf16, #tpu.memory_space<vmem>>, vector<8x1x12xbf16>,
    %c0_45 = arith.constant 0 : index
    %c1_46 = arith.constant 1 : index
    %c0_47 = arith.constant 0 : index
    %39 = vector.load %arg12[%c0_45, %c1_46, %c0_47] : memref<10x8x4xbf16, #tpu.memory_space<vmem>>, vector<8x7x4xbf16>
    %c1_48 = arith.constant 1 : index
    %c1_49 = arith.constant 1 : index
    %c0_50 = arith.constant 0 : index
    %40 = vector.load %arg12[%c1_48, %c1_49, %c0_50] : memref<10x8x4xbf16, #tpu.memory_space<vmem>>, vector<8x7x4xbf16>
    %c2_51 = arith.constant 2 : index
    %c1_52 = arith.constant 1 : index
    %c0_53 = arith.constant 0 : index
    %41 = vector.load %arg12[%c2_51, %c1_52, %c0_53] : memref<10x8x4xbf16, #tpu.memory_space<vmem>>, vector<8x7x4xbf16>
    %42 = tpu.concatenate %39, %40, %41 in 2 : vector<8x7x4xbf16>, vector<8x7x4xbf16>, vector<8x7x4xbf16> -> vector<8x7x12xbf16>
    %c0_54 = arith.constant 0 : index
    %c0_55 = arith.constant 0 : index
    %c24_56 = arith.constant 24 : index
    %43 = vector.load %arg13[%c0_54, %c0_55, %c24_56] : memref<8x8x36xbf16, #tpu.memory_space<vmem>>, vector<8x7x12xbf16>
    tpu.vector_store %arg13[%c0_54, %c0_55, %c24_56], %42 {strides = array<i32>} : memref<8x8x36xbf16, #tpu.memory_space<vmem>>, vector<8x7x12xbf16>,
    %c0_57 = arith.constant 0 : index
    %c0_58 = arith.constant 0 : index
    %c0_59 = arith.constant 0 : index
    %44 = vector.load %arg13[%c0_57, %c0_58, %c0_59] : memref<8x8x36xbf16, #tpu.memory_space<vmem>>, vector<8x8x36xbf16>
    %45 = vector.shape_cast %44 : vector<8x8x36xbf16> to vector<64x36xbf16>
    %c0_60 = arith.constant 0 : index
    %c0_61 = arith.constant 0 : index
    %46 = vector.load %arg7[%c0_60, %c0_61] : memref<36x4xbf16, #tpu.memory_space<vmem>>, vector<36x4xbf16>
    %cst_62 = arith.constant dense<0.000000e+00> : vector<64x4xf32>
    %47 = tpu.matmul %45, %46, %cst_62 {dimension_numbers = #tpu.dot_dimension_numbers<[1], [0], [0], [1], [0, 0, 1, 1], [], []>} : vector<64x36xbf16>, vector<36x4xbf16>, vector<64x4xf32> -> vector<64x4xf32>
    %c0_63 = arith.constant 0 : index
    %c0_64 = arith.constant 0 : index
    %48 = vector.load %arg8[%c0_63, %c0_64] : memref<1x4xf32, #tpu.memory_space<vmem>>, vector<1x4xf32>
    %49 = vector.broadcast %48 : vector<1x4xf32> to vector<64x4xf32>
    %50 = arith.addf %47, %49 : vector<64x4xf32>
    %cst_65 = arith.constant 0.000000e+00 : f32
    %51 = vector.broadcast %cst_65 : f32 to vector<64x4xf32>
    %52 = arith.maximumf %50, %51 : vector<64x4xf32>
    %53 = arith.truncf %52 : vector<64x4xf32> to vector<64x4xbf16>
    %c0_66 = arith.constant 0 : index
    %c0_67 = arith.constant 0 : index
    %54 = vector.load %arg9[%c0_66, %c0_67] : memref<4x16xbf16, #tpu.memory_space<vmem>>, vector<4x16xbf16>
    %cst_68 = arith.constant dense<0.000000e+00> : vector<64x16xf32>
    %55 = tpu.matmul %53, %54, %cst_68 {dimension_numbers = #tpu.dot_dimension_numbers<[1], [0], [0], [1], [0, 0, 1, 1], [], []>} : vector<64x4xbf16>, vector<4x16xbf16>, vector<64x16xf32> -> vector<64x16xf32>
    %c0_69 = arith.constant 0 : index
    %c0_70 = arith.constant 0 : index
    %56 = vector.load %arg10[%c0_69, %c0_70] : memref<1x16xf32, #tpu.memory_space<vmem>>, vector<1x16xf32>
    %57 = vector.broadcast %56 : vector<1x16xf32> to vector<64x16xf32>
    %58 = arith.addf %55, %57 : vector<64x16xf32>
    %c0_71 = arith.constant 0 : index
    %c0_72 = arith.constant 0 : index
    %c0_73 = arith.constant 0 : index
    %c0_74 = arith.constant 0 : index
    %59 = vector.load %arg3[%c0_71, %c0_72, %c0_73, %c0_74] : memref<1x8x8x16xf32, #tpu.memory_space<vmem>>, vector<1x8x8x16xf32>
    %60 = vector.shape_cast %59 : vector<1x8x8x16xf32> to vector<64x16xf32>
    %61 = arith.addf %58, %60 : vector<64x16xf32>
    %cst_75 = arith.constant 0.000000e+00 : f32
    %62 = vector.broadcast %cst_75 : f32 to vector<64x16xf32>
    %63 = arith.maximumf %61, %62 : vector<64x16xf32>
    %64 = vector.shape_cast %63 : vector<64x16xf32> to vector<1x8x8x16xf32>
    %c0_76 = arith.constant 0 : index
    %c0_77 = arith.constant 0 : index
    %c0_78 = arith.constant 0 : index
    %c0_79 = arith.constant 0 : index
    %65 = vector.load %arg11[%c0_76, %c0_77, %c0_78, %c0_79] : memref<1x8x8x16xf32, #tpu.memory_space<vmem>>, vector<1x8x8x16xf32>
    tpu.vector_store %arg11[%c0_76, %c0_77, %c0_78, %c0_79], %64 {strides = array<i32>} : memref<1x8x8x16xf32, #tpu.memory_space<vmem>>, vector<1x8x8x16xf32>,
    return
  }
  func.func @transform_0(%arg0: i32, %arg1: i32) -> (i32, i32, i32, i32) {
    %c8_i32 = arith.constant 8 : i32
    %0 = arith.muli %arg1, %c8_i32 : i32
    %c1_i32 = arith.constant 1 : i32
    %1 = arith.subi %0, %c1_i32 : i32
    %c0_i32 = arith.constant 0 : i32
    %2 = arith.maxsi %1, %c0_i32 : i32
    %c0_i32_0 = arith.constant 0 : i32
    %c0_i32_1 = arith.constant 0 : i32
    %c0_i32_2 = arith.constant 0 : i32
    return %arg0, %2, %c0_i32_0, %c0_i32_1 : i32, i32, i32, i32
  }
  func.func @transform_1(%arg0: i32, %arg1: i32) -> (i32, i32, i32, i32) {
    %c0_i32 = arith.constant 0 : i32
    %c0_i32_0 = arith.constant 0 : i32
    %c0_i32_1 = arith.constant 0 : i32
    return %arg0, %arg1, %c0_i32, %c0_i32_0 : i32, i32, i32, i32
  }
  func.func @transform_2(%arg0: i32, %arg1: i32) -> (i32, i32, i32, i32) {
    %c8_i32 = arith.constant 8 : i32
    %0 = arith.muli %arg1, %c8_i32 : i32
    %c8_i32_0 = arith.constant 8 : i32
    %1 = arith.addi %0, %c8_i32_0 : i32
    %c7_i32 = arith.constant 7 : i32
    %2 = arith.minsi %1, %c7_i32 : i32
    %c0_i32 = arith.constant 0 : i32
    %c0_i32_1 = arith.constant 0 : i32
    %c0_i32_2 = arith.constant 0 : i32
    return %arg0, %2, %c0_i32, %c0_i32_1 : i32, i32, i32, i32
  }
  func.func @transform_3(%arg0: i32, %arg1: i32) -> (i32, i32) {
    %c0_i32 = arith.constant 0 : i32
    %c0_i32_0 = arith.constant 0 : i32
    %c0_i32_1 = arith.constant 0 : i32
    return %c0_i32, %c0_i32_0 : i32, i32
  }
  func.func @transform_4(%arg0: i32, %arg1: i32) -> (i32, i32) {
    %c0_i32 = arith.constant 0 : i32
    %c0_i32_0 = arith.constant 0 : i32
    %c0_i32_1 = arith.constant 0 : i32
    return %c0_i32, %c0_i32_0 : i32, i32
  }
  func.func @transform_5(%arg0: i32, %arg1: i32) -> (i32, i32) {
    %c0_i32 = arith.constant 0 : i32
    %c0_i32_0 = arith.constant 0 : i32
    %c0_i32_1 = arith.constant 0 : i32
    return %c0_i32, %c0_i32_0 : i32, i32
  }
  func.func @transform_6(%arg0: i32, %arg1: i32) -> (i32, i32) {
    %c0_i32 = arith.constant 0 : i32
    %c0_i32_0 = arith.constant 0 : i32
    %c0_i32_1 = arith.constant 0 : i32
    return %c0_i32, %c0_i32_0 : i32, i32
  }
  func.func @transform_7(%arg0: i32, %arg1: i32) -> (i32, i32) {
    %c0_i32 = arith.constant 0 : i32
    %c0_i32_0 = arith.constant 0 : i32
    %c0_i32_1 = arith.constant 0 : i32
    return %c0_i32, %c0_i32_0 : i32, i32
  }
  func.func @transform_8(%arg0: i32, %arg1: i32) -> (i32, i32) {
    %c0_i32 = arith.constant 0 : i32
    %c0_i32_0 = arith.constant 0 : i32
    %c0_i32_1 = arith.constant 0 : i32
    return %c0_i32, %c0_i32_0 : i32, i32
  }
  func.func @transform_9(%arg0: i32, %arg1: i32) -> (i32, i32, i32, i32) {
    %c0_i32 = arith.constant 0 : i32
    %c0_i32_0 = arith.constant 0 : i32
    %c0_i32_1 = arith.constant 0 : i32
    return %arg0, %arg1, %c0_i32, %c0_i32_0 : i32, i32, i32, i32
  }
}

</mosaic_0001>

<llo_original>
// kernel: tpu_custom_call.1
$region0: #{tpu_custom_call.1}
  #allocation0 [shape = 'u32[]', space=smem, size = 0x4, offset = 0x4, fixed_abs, tag = 'smem constant byte address 0x4 - core index']
  #allocation1 [shape = 'u32[144,128]{1,0:T(1,128)}', space=vmem, size = 0x12000, scoped, tag = 'internal scratch']
  #allocation2 [shape = 'bf16[10,8,4]{2,1,0:T(8,128)(2,1)}', space=vmem, size = 0x5000, scoped, tag = 'scratch operand']
  #allocation3 [shape = 'bf16[8,8,36]{2,1,0:T(8,128)(2,1)}', space=vmem, size = 0x4000, scoped, tag = 'scratch operand']
  %s0 = inlined_call_operand.hbm [shape: f32[2,8,8,16], index: 0, kind: input, shape index: {}]
  %s1 = inlined_call_operand.hbm [shape: f32[2,8,8,16], index: 1, kind: input, shape index: {}]
  %s2 = inlined_call_operand.hbm [shape: f32[2,8,8,16], index: 2, kind: input, shape index: {}]
  %s3 = inlined_call_operand.vmem [shape: bf16[16,4], index: 3, kind: input, shape index: {}]
  %s4 = inlined_call_operand.vmem [shape: f32[1,4], index: 4, kind: input, shape index: {}]
  %s5 = inlined_call_operand.vmem [shape: bf16[36,4], index: 5, kind: input, shape index: {}]
  %s6 = inlined_call_operand.vmem [shape: f32[1,4], index: 6, kind: input, shape index: {}]
  %s7 = inlined_call_operand.vmem [shape: bf16[4,16], index: 7, kind: input, shape index: {}]
  %s8 = inlined_call_operand.vmem [shape: f32[1,16], index: 8, kind: input, shape index: {}]
  %s9 = inlined_call_operand.hbm [shape: f32[2,8,8,16], index: 9, kind: output, shape index: {}]
  %s10 = sld [smem:[#allocation0]]
  $region97: #{tpu_custom_call.1} parent=0
    _
  %s12 = ssub.s32 1, %s10
  %s13 = scalar_select 0, %s12, %s10
  $region1: #{tpu_custom_call.1} parent=0
    #allocation4 [shape = 'u8[8192]{0}', space=vmem, size = 0x2000, scoped, tag = 'input window, operand 0']
    #allocation5 [shape = 's32[2]{0}', space=sflag, size = 0x8, scoped, tag = 'scoped memory for tpu_custom_call.1']
    #allocation6 [shape = 's32[2]{0}', space=sflag, size = 0x8, scoped, tag = 'scoped memory for tpu_custom_call.1']
    #allocation7 [shape = 'u8[65536]{0}', space=vmem, size = 0x10000, scoped, tag = 'input window, operand 1']
    #allocation8 [shape = 's32[2]{0}', space=sflag, size = 0x8, scoped, tag = 'scoped memory for tpu_custom_call.1']
    #allocation9 [shape = 'u8[8192]{0}', space=vmem, size = 0x2000, scoped, tag = 'input window, operand 2']
    #allocation10 [shape = 'u8[65536]{0}', space=vmem, size = 0x10000, scoped, tag = 'output window, operand 0']
    %14 = vsyncpa [#allocation5], 0
    %s15 = scalar_lea.sflag [#allocation5], 1
    %16 = vsyncpa %s15, 0
    %17 = vsyncpa [#allocation8], 0
    %s18 = scalar_lea.sflag [#allocation8], 1
    %19 = vsyncpa %s18, 0
    %20 = vsyncpa [#allocation6], 0
    %s21 = scalar_lea.sflag [#allocation6], 1
    %22 = vsyncpa %s21, 0
    loop: start=0, step=1, limit=4
    $region2: #{tpu_custom_call.1} parent=1 // loop_pre_header
      _
    $region3: #{tpu_custom_call.1} parent=1 // loop_header
      %s24 = sphi 0, %s28
      %p25 = scmp.ge.s32.totalorder %s24, 4
      %s31 = sphi 0, %s43
      %s32 = sphi 0, %s39
      %s33 = sphi 0, %s31
      %s34 = sphi 0, %s32
      %s35 = sphi 0, %s33
      %s36 = sphi 0, %s34
      %s56 = sphi 0, %s58
      %s59 = sphi 0, %s56
      %s60 = sphi 0, %s59
      %s76 = sphi 0, %s60
      %s84 = sphi 0, %s86
      %s87 = sphi 0, %s84
      %s88 = sphi 0, %s87
      %s104 = sphi 0, %s88
      %s120 = sphi 0, %s122
      %s123 = sphi 0, %s120
      %s124 = sphi 0, %s123
      %s140 = sphi 0, %s124
      %s144 = sphi 0, %s144
      %s146 = sphi 0, %s144
      %s147 = sphi 0, %s146
      %s161 = sphi 0, %s147
      %s165 = sphi 0, %s165
      %s167 = sphi 0, %s165
      %s168 = sphi 0, %s167
      %s182 = sphi 0, %s168
      %s186 = sphi 0, %s186
      %s188 = sphi 0, %s186
      %s189 = sphi 0, %s188
      %s203 = sphi 0, %s189
      %s207 = sphi 0, %s207
      %s209 = sphi 0, %s207
      %s210 = sphi 0, %s209
      %s224 = sphi 0, %s210
      %s228 = sphi 0, %s228
      %s230 = sphi 0, %s228
      %s231 = sphi 0, %s230
      %s245 = sphi 0, %s231
      %s249 = sphi 0, %s249
      %s251 = sphi 0, %s249
      %s252 = sphi 0, %s251
      %s266 = sphi 0, %s252
      %s274 = sphi 0, %s276
      %s277 = sphi 0, %s274
      %s278 = sphi 0, %s277
      %s294 = sphi 0, %s278
    $region4: #{tpu_custom_call.1} parent=1 // loop_header_branch
      %27 = sbr.rel (%p25) target = $region8
    $region5: #{tpu_custom_call.1} parent=1 // loop_body
      %s29 = ssub.s32 %s24, 1
      %s30 = ssub.s32 %s24, 2
      %s37 = sadd.s32 1, %s32
      %p38 = scmp.ge.s32.totalorder %s37, 1
      %s39 = scalar_select %p38, 0, %s37
      %s40 = sadd.s32 1, %s31
      %s41 = scalar_select %p38, %s40, %s31
      %p42 = scmp.ge.s32.totalorder %s41, 2
      %s43 = scalar_select %p42, 0, %s41
      %s44 = smul.u32 %s32, 8
      %s45 = ssub.s32 %s44, 1
      %p46 = scmp.gt.s32.totalorder %s45, 0
      %s47 = scalar_select %p46, %s45, 0
      %s48 = smul.u32 %s39, 8
      %s49 = ssub.s32 %s48, 1
      %p50 = scmp.gt.s32.totalorder %s49, 0
      %s51 = scalar_select %p50, %s49, 0
      %s52 = ssub.s32 %s31, %s43
      %s53 = ssub.s32 %s47, %s51
      %s54 = sor.u32 %s52, %s53
      %p55 = scmp.eq.s32.totalorder %s54, 0
      %s57 = sadd.s32 %s56, 1
      %s58 = scalar_select %p55, %s56, %s57
      %p61 = pneg %p55
      %p62 = scmp.eq.s32.totalorder %s24, 1
      %p63 = por %p61, %p62
      %p64 = scmp.ne.s32.totalorder %s56, %s59
      %p65 = scmp.eq.s32.totalorder %s24, 0
      %p66 = por %p64, %p65
      %p67 = scmp.ne.s32.totalorder %s56, %s59
      %p68 = scmp.eq.s32.totalorder %s29, 1
      %p69 = por %p67, %p68
      %p70 = scmp.ne.s32.totalorder %s59, %s60
      %p71 = scmp.eq.s32.totalorder %s29, 0
      %p72 = por %p70, %p71
      %p73 = scmp.ne.s32.totalorder %s59, %s60
      %p74 = scmp.eq.s32.totalorder %s30, 1
      %p75 = por %p73, %p74
      %p77 = scmp.ne.s32.totalorder %s60, %s76
      %p78 = scmp.eq.s32.totalorder %s30, 0
      %p79 = por %p77, %p78
      %s80 = ssub.s32 %s31, %s43
      %s81 = ssub.s32 %s32, %s39
      %s82 = sor.u32 %s80, %s81
      %p83 = scmp.eq.s32.totalorder %s82, 0
      %s85 = sadd.s32 %s84, 1
      %s86 = scalar_select %p83, %s84, %s85
      %p89 = pneg %p83
      %p90 = scmp.eq.s32.totalorder %s24, 1
      %p91 = por %p89, %p90
      %p92 = scmp.ne.s32.totalorder %s84, %s87
      %p93 = scmp.eq.s32.totalorder %s24, 0
      %p94 = por %p92, %p93
      %p95 = scmp.ne.s32.totalorder %s84, %s87
      %p96 = scmp.eq.s32.totalorder %s29, 1
      %p97 = por %p95, %p96
      %p98 = scmp.ne.s32.totalorder %s87, %s88
      %p99 = scmp.eq.s32.totalorder %s29, 0
      %p100 = por %p98, %p99
      %p101 = scmp.ne.s32.totalorder %s87, %s88
      %p102 = scmp.eq.s32.totalorder %s30, 1
      %p103 = por %p101, %p102
      %p105 = scmp.ne.s32.totalorder %s88, %s104
      %p106 = scmp.eq.s32.totalorder %s30, 0
      %p107 = por %p105, %p106
      %s108 = smul.u32 %s32, 8
      %s109 = sadd.s32 %s108, 8
      %p110 = scmp.lt.s32.totalorder %s109, 7
      %s111 = scalar_select %p110, %s109, 7
      %s112 = smul.u32 %s39, 8
      %s113 = sadd.s32 %s112, 8
      %p114 = scmp.lt.s32.totalorder %s113, 7
      %s115 = scalar_select %p114, %s113, 7
      %s116 = ssub.s32 %s31, %s43
      %s117 = ssub.s32 %s111, %s115
      %s118 = sor.u32 %s116, %s117
      %p119 = scmp.eq.s32.totalorder %s118, 0
      %s121 = sadd.s32 %s120, 1
      %s122 = scalar_select %p119, %s120, %s121
      %p125 = pneg %p119
      %p126 = scmp.eq.s32.totalorder %s24, 1
      %p127 = por %p125, %p126
      %p128 = scmp.ne.s32.totalorder %s120, %s123
      %p129 = scmp.eq.s32.totalorder %s24, 0
      %p130 = por %p128, %p129
      %p131 = scmp.ne.s32.totalorder %s120, %s123
      %p132 = scmp.eq.s32.totalorder %s29, 1
      %p133 = por %p131, %p132
      %p134 = scmp.ne.s32.totalorder %s123, %s124
      %p135 = scmp.eq.s32.totalorder %s29, 0
      %p136 = por %p134, %p135
      %p137 = scmp.ne.s32.totalorder %s123, %s124
      %p138 = scmp.eq.s32.totalorder %s30, 1
      %p139 = por %p137, %p138
      %p141 = scmp.ne.s32.totalorder %s124, %s140
      %p142 = scmp.eq.s32.totalorder %s30, 0
      %p143 = por %p141, %p142
      %s145 = sadd.s32 %s144, 1
      %p148 = scmp.eq.s32.totalorder %s24, 1
      %p149 = scmp.ne.s32.totalorder %s144, %s146
      %p150 = scmp.eq.s32.totalorder %s24, 0
      %p151 = por %p149, %p150
      %p152 = scmp.ne.s32.totalorder %s144, %s146
      %p153 = scmp.eq.s32.totalorder %s29, 1
      %p154 = por %p152, %p153
      %p155 = scmp.ne.s32.totalorder %s146, %s147
      %p156 = scmp.eq.s32.totalorder %s29, 0
      %p157 = por %p155, %p156
      %p158 = scmp.ne.s32.totalorder %s146, %s147
      %p159 = scmp.eq.s32.totalorder %s30, 1
      %p160 = por %p158, %p159
      %p162 = scmp.ne.s32.totalorder %s147, %s161
      %p163 = scmp.eq.s32.totalorder %s30, 0
      %p164 = por %p162, %p163
      %s166 = sadd.s32 %s165, 1
      %p169 = scmp.eq.s32.totalorder %s24, 1
      %p170 = scmp.ne.s32.totalorder %s165, %s167
      %p171 = scmp.eq.s32.totalorder %s24, 0
      %p172 = por %p170, %p171
      %p173 = scmp.ne.s32.totalorder %s165, %s167
      %p174 = scmp.eq.s32.totalorder %s29, 1
      %p175 = por %p173, %p174
      %p176 = scmp.ne.s32.totalorder %s167, %s168
      %p177 = scmp.eq.s32.totalorder %s29, 0
      %p178 = por %p176, %p177
      %p179 = scmp.ne.s32.totalorder %s167, %s168
      %p180 = scmp.eq.s32.totalorder %s30, 1
      %p181 = por %p179, %p180
      %p183 = scmp.ne.s32.totalorder %s168, %s182
      %p184 = scmp.eq.s32.totalorder %s30, 0
      %p185 = por %p183, %p184
      %s187 = sadd.s32 %s186, 1
      %p190 = scmp.eq.s32.totalorder %s24, 1
      %p191 = scmp.ne.s32.totalorder %s186, %s188
      %p192 = scmp.eq.s32.totalorder %s24, 0
      %p193 = por %p191, %p192
      %p194 = scmp.ne.s32.totalorder %s186, %s188
      %p195 = scmp.eq.s32.totalorder %s29, 1
      %p196 = por %p194, %p195
      %p197 = scmp.ne.s32.totalorder %s188, %s189
      %p198 = scmp.eq.s32.totalorder %s29, 0
      %p199 = por %p197, %p198
      %p200 = scmp.ne.s32.totalorder %s188, %s189
      %p201 = scmp.eq.s32.totalorder %s30, 1
      %p202 = por %p200, %p201
      %p204 = scmp.ne.s32.totalorder %s189, %s203
      %p205 = scmp.eq.s32.totalorder %s30, 0
      %p206 = por %p204, %p205
      %s208 = sadd.s32 %s207, 1
      %p211 = scmp.eq.s32.totalorder %s24, 1
      %p212 = scmp.ne.s32.totalorder %s207, %s209
      %p213 = scmp.eq.s32.totalorder %s24, 0
      %p214 = por %p212, %p213
      %p215 = scmp.ne.s32.totalorder %s207, %s209
      %p216 = scmp.eq.s32.totalorder %s29, 1
      %p217 = por %p215, %p216
      %p218 = scmp.ne.s32.totalorder %s209, %s210
      %p219 = scmp.eq.s32.totalorder %s29, 0
      %p220 = por %p218, %p219
      %p221 = scmp.ne.s32.totalorder %s209, %s210
      %p222 = scmp.eq.s32.totalorder %s30, 1
      %p223 = por %p221, %p222
      %p225 = scmp.ne.s32.totalorder %s210, %s224
      %p226 = scmp.eq.s32.totalorder %s30, 0
      %p227 = por %p225, %p226
      %s229 = sadd.s32 %s228, 1
      %p232 = scmp.eq.s32.totalorder %s24, 1
      %p233 = scmp.ne.s32.totalorder %s228, %s230
      %p234 = scmp.eq.s32.totalorder %s24, 0
      %p235 = por %p233, %p234
      %p236 = scmp.ne.s32.totalorder %s228, %s230
      %p237 = scmp.eq.s32.totalorder %s29, 1
      %p238 = por %p236, %p237
      %p239 = scmp.ne.s32.totalorder %s230, %s231
      %p240 = scmp.eq.s32.totalorder %s29, 0
      %p241 = por %p239, %p240
      %p242 = scmp.ne.s32.totalorder %s230, %s231
      %p243 = scmp.eq.s32.totalorder %s30, 1
      %p244 = por %p242, %p243
      %p246 = scmp.ne.s32.totalorder %s231, %s245
      %p247 = scmp.eq.s32.totalorder %s30, 0
      %p248 = por %p246, %p247
      %s250 = sadd.s32 %s249, 1
      %p253 = scmp.eq.s32.totalorder %s24, 1
      %p254 = scmp.ne.s32.totalorder %s249, %s251
      %p255 = scmp.eq.s32.totalorder %s24, 0
      %p256 = por %p254, %p255
      %p257 = scmp.ne.s32.totalorder %s249, %s251
      %p258 = scmp.eq.s32.totalorder %s29, 1
      %p259 = por %p257, %p258
      %p260 = scmp.ne.s32.totalorder %s251, %s252
      %p261 = scmp.eq.s32.totalorder %s29, 0
      %p262 = por %p260, %p261
      %p263 = scmp.ne.s32.totalorder %s251, %s252
      %p264 = scmp.eq.s32.totalorder %s30, 1
      %p265 = por %p263, %p264
      %p267 = scmp.ne.s32.totalorder %s252, %s266
      %p268 = scmp.eq.s32.totalorder %s30, 0
      %p269 = por %p267, %p268
      %s270 = ssub.s32 %s31, %s43
      %s271 = ssub.s32 %s32, %s39
      %s272 = sor.u32 %s270, %s271
      %p273 = scmp.eq.s32.totalorder %s272, 0
      %s275 = sadd.s32 %s274, 1
      %s276 = scalar_select %p273, %s274, %s275
      %p279 = pneg %p273
      %p280 = scmp.eq.s32.totalorder %s24, 1
      %p281 = por %p279, %p280
      %p282 = scmp.ne.s32.totalorder %s274, %s277
      %p283 = scmp.eq.s32.totalorder %s24, 0
      %p284 = por %p282, %p283
      %p285 = scmp.ne.s32.totalorder %s274, %s277
      %p286 = scmp.eq.s32.totalorder %s29, 1
      %p287 = por %p285, %p286
      %p288 = scmp.ne.s32.totalorder %s277, %s278
      %p289 = scmp.eq.s32.totalorder %s29, 0
      %p290 = por %p288, %p289
      %p291 = scmp.ne.s32.totalorder %s277, %s278
      %p292 = scmp.eq.s32.totalorder %s30, 1
      %p293 = por %p291, %p292
      %p295 = scmp.ne.s32.totalorder %s278, %s294
      %p296 = scmp.eq.s32.totalorder %s30, 0
      %p297 = por %p295, %p296
      %p298 = scmp.le.s32.totalorder 1, %s24
      %p299 = scmp.lt.s32.totalorder %s24, 3
      %p300 = pnand %p298, %p299
      %p301 = pneg %p300
      // Predicated region
      $region9: #{tpu_custom_call.1} parent=5 // pred_check
        _
      $region10: #{tpu_custom_call.1} parent=5 // pred_check_branch
        %303 = sbr.rel (%p300) target = $region12
      $region11: #{tpu_custom_call.1} parent=5 // pred_region
        %s304 = ssub.s32 %s24, 1
        // Predicated region
        $region13: #{tpu_custom_call.1} parent=11 // pred_check
          %p305 = pneg %p157
        $region14: #{tpu_custom_call.1} parent=11 // pred_check_branch
          %307 = sbr.rel (%p305) target = $region16
        $region15: #{tpu_custom_call.1} parent=11 // pred_region
          _
        $region16: #{tpu_custom_call.1} parent=11 // pred_fallthru
          _
        // Predicated region
        $region17: #{tpu_custom_call.1} parent=11 // pred_check
          %p308 = pneg %p178
        $region18: #{tpu_custom_call.1} parent=11 // pred_check_branch
          %310 = sbr.rel (%p308) target = $region20
        $region19: #{tpu_custom_call.1} parent=11 // pred_region
          _
        $region20: #{tpu_custom_call.1} parent=11 // pred_fallthru
          _
        // Predicated region
        $region21: #{tpu_custom_call.1} parent=11 // pred_check
          %p311 = pneg %p199
        $region22: #{tpu_custom_call.1} parent=11 // pred_check_branch
          %313 = sbr.rel (%p311) target = $region24
        $region23: #{tpu_custom_call.1} parent=11 // pred_region
          _
        $region24: #{tpu_custom_call.1} parent=11 // pred_fallthru
          _
        // Predicated region
        $region25: #{tpu_custom_call.1} parent=11 // pred_check
          %p314 = pneg %p220
        $region26: #{tpu_custom_call.1} parent=11 // pred_check_branch
          %316 = sbr.rel (%p314) target = $region28
        $region27: #{tpu_custom_call.1} parent=11 // pred_region
          _
        $region28: #{tpu_custom_call.1} parent=11 // pred_fallthru
          _
        // Predicated region
        $region29: #{tpu_custom_call.1} parent=11 // pred_check
          %p317 = pneg %p241
        $region30: #{tpu_custom_call.1} parent=11 // pred_check_branch
          %319 = sbr.rel (%p317) target = $region32
        $region31: #{tpu_custom_call.1} parent=11 // pred_region
          _
        $region32: #{tpu_custom_call.1} parent=11 // pred_fallthru
          _
        // Predicated region
        $region33: #{tpu_custom_call.1} parent=11 // pred_check
          %p320 = pneg %p262
        $region34: #{tpu_custom_call.1} parent=11 // pred_check_branch
          %322 = sbr.rel (%p320) target = $region36
        $region35: #{tpu_custom_call.1} parent=11 // pred_region
          _
        $region36: #{tpu_custom_call.1} parent=11 // pred_fallthru
          _
      $region12: #{tpu_custom_call.1} parent=5 // pred_fallthru
        _
      %p323 = scmp.lt.s32.totalorder %s24, 2
      // Predicated region
      $region37: #{tpu_custom_call.1} parent=5 // pred_check
        %p324 = pneg %p323
      $region38: #{tpu_custom_call.1} parent=5 // pred_check_branch
        %326 = sbr.rel (%p324) target = $region40
      $region39: #{tpu_custom_call.1} parent=5 // pred_region
        // Predicated region
        $region41: #{tpu_custom_call.1} parent=39 // pred_check
          %p327 = pneg %p66
        $region42: #{tpu_custom_call.1} parent=39 // pred_check_branch
          %329 = sbr.rel (%p327) target = $region44
        $region43: #{tpu_custom_call.1} parent=39 // pred_region
          %s330 = sand.u32 %s56, 1
          %s331 = scalar_lea.sflag [#allocation5], %s330
          %s332 = sand.u32 %s56, 1
          %s333 = smul.addr %s332, 8
          %s334 = scalar_lea.vmem [#allocation4], %s333
          %s335 = smul.u32 %s32, 8
          %s336 = ssub.s32 %s335, 1
          %p337 = scmp.gt.s32.totalorder %s336, 0
          %s338 = scalar_select %p337, %s336, 0
          %s340 = ssub.s32 128, 128
          %341 = vsyncadd %s331, %s340
          %s342 = smul.addr %s31, 8
          %s343 = sadd.s32 %s338, %s342
          %s344 = smul.addr %s343, 128
          %s345 = scalar_lea.hbm %s0, %s344
          %s347 = sshll.u32 %s334, 4
          %s348 = int_to_ptr.vmem [resolvable:$true] %s347
          %350 = dma.hbm_to_vmem [thread:$0]  %s345, 128, %s348, %s331
        $region44: #{tpu_custom_call.1} parent=39 // pred_fallthru
          _
        // Predicated region
        $region45: #{tpu_custom_call.1} parent=39 // pred_check
          %p351 = pneg %p94
        $region46: #{tpu_custom_call.1} parent=39 // pred_check_branch
          %353 = sbr.rel (%p351) target = $region48
        $region47: #{tpu_custom_call.1} parent=39 // pred_region
          %s354 = sand.u32 %s24, 1
          %s355 = scalar_lea.sflag [#allocation8], %s354
          %s356 = sand.u32 %s84, 1
          %s357 = smul.addr %s356, 64
          %s358 = scalar_lea.vmem [#allocation7], %s357
          %s359 = smul.u32 8, %s32
          %s361 = ssub.s32 1024, 1024
          %362 = vsyncadd %s355, %s361
          %s363 = smul.addr %s31, 8
          %s364 = sadd.s32 %s359, %s363
          %s365 = smul.addr %s364, 128
          %s366 = scalar_lea.hbm %s1, %s365
          %s367 = sshll.u32 %s358, 4
          %s368 = int_to_ptr.vmem [resolvable:$true] %s367
          %373 = dma.hbm_to_vmem [thread:$0]  %s366, 1024, %s368, %s355, 128, 128, 8
        $region48: #{tpu_custom_call.1} parent=39 // pred_fallthru
          _
        // Predicated region
        $region49: #{tpu_custom_call.1} parent=39 // pred_check
          %p374 = pneg %p130
        $region50: #{tpu_custom_call.1} parent=39 // pred_check_branch
          %376 = sbr.rel (%p374) target = $region52
        $region51: #{tpu_custom_call.1} parent=39 // pred_region
          %s377 = sand.u32 %s24, 1
          %s378 = scalar_lea.sflag [#allocation8], %s377
          %s379 = sand.u32 %s120, 1
          %s380 = smul.addr %s379, 8
          %s381 = scalar_lea.vmem [#allocation9], %s380
          %s382 = smul.u32 %s32, 8
          %s383 = sadd.s32 %s382, 8
          %p384 = scmp.lt.s32.totalorder %s383, 7
          %s385 = scalar_select %p384, %s383, 7
          %s387 = ssub.s32 128, 128
          %388 = vsyncadd %s378, %s387
          %s389 = smul.addr %s31, 8
          %s390 = sadd.s32 %s385, %s389
          %s391 = smul.addr %s390, 128
          %s392 = scalar_lea.hbm %s2, %s391
          %s394 = sshll.u32 %s381, 4
          %s395 = int_to_ptr.vmem [resolvable:$true] %s394
          %397 = dma.hbm_to_vmem [thread:$0]  %s392, 128, %s395, %s378
        $region52: #{tpu_custom_call.1} parent=39 // pred_fallthru
          _
      $region40: #{tpu_custom_call.1} parent=5 // pred_fallthru
        _
      %p398 = scmp.le.s32.totalorder 1, %s24
      %p399 = scmp.lt.s32.totalorder %s24, 3
      %p400 = pnand %p398, %p399
      %p401 = pneg %p400
      // Predicated region
      $region53: #{tpu_custom_call.1} parent=5 // pred_check
        _
      $region54: #{tpu_custom_call.1} parent=5 // pred_check_branch
        %403 = sbr.rel (%p400) target = $region56
      $region55: #{tpu_custom_call.1} parent=5 // pred_region
        %s404 = ssub.s32 %s24, 1
        %s405 = sand.u32 %s59, 1
        %s406 = scalar_lea.sflag [#allocation5], %s405
        %s407 = sand.u32 %s59, 1
        %s408 = smul.addr %s407, 8
        %s409 = scalar_lea.vmem [#allocation4], %s408
        // Predicated region
        $region57: #{tpu_custom_call.1} parent=55 // pred_check
          %p410 = pneg %p72
        $region58: #{tpu_custom_call.1} parent=55 // pred_check_branch
          %412 = sbr.rel (%p410) target = $region60
        $region59: #{tpu_custom_call.1} parent=55 // pred_region
          %413 = dma.done %s406, 128
        $region60: #{tpu_custom_call.1} parent=55 // pred_fallthru
          _
        %s414 = sand.u32 %s29, 1
        %s415 = scalar_lea.sflag [#allocation8], %s414
        %s416 = sand.u32 %s87, 1
        %s417 = smul.addr %s416, 64
        %s418 = scalar_lea.vmem [#allocation7], %s417
        // Predicated region
        $region61: #{tpu_custom_call.1} parent=55 // pred_check
          %p419 = pneg %p100
        $region62: #{tpu_custom_call.1} parent=55 // pred_check_branch
          %421 = sbr.rel (%p419) target = $region64
        $region63: #{tpu_custom_call.1} parent=55 // pred_region
          %422 = dma.done %s415, 1024
        $region64: #{tpu_custom_call.1} parent=55 // pred_fallthru
          _
        %s423 = sand.u32 %s29, 1
        %s424 = scalar_lea.sflag [#allocation8], %s423
        %s425 = sand.u32 %s123, 1
        %s426 = smul.addr %s425, 8
        %s427 = scalar_lea.vmem [#allocation9], %s426
        // Predicated region
        $region65: #{tpu_custom_call.1} parent=55 // pred_check
          %p428 = pneg %p136
        $region66: #{tpu_custom_call.1} parent=55 // pred_check_branch
          %430 = sbr.rel (%p428) target = $region68
        $region67: #{tpu_custom_call.1} parent=55 // pred_region
          %431 = dma.done %s424, 128
        $region68: #{tpu_custom_call.1} parent=55 // pred_fallthru
          _
        %s432 = sand.u32 %s59, 1
        %s433 = scalar_lea.sflag [#allocation5], %s432
        %s434 = sand.u32 %s59, 1
        %s435 = smul.addr %s434, 8
        %s436 = scalar_lea.vmem [#allocation4], %s435
        %p437 = pneg %p72
        %p438 = pneg %p69
        %s439 = sand.u32 %s29, 1
        %s440 = scalar_lea.sflag [#allocation8], %s439
        %s441 = sand.u32 %s87, 1
        %s442 = smul.addr %s441, 64
        %s443 = scalar_lea.vmem [#allocation7], %s442
        %p444 = pneg %p100
        %p445 = pneg %p97
        %s446 = sand.u32 %s29, 1
        %s447 = scalar_lea.sflag [#allocation8], %s446
        %s448 = sand.u32 %s123, 1
        %s449 = smul.addr %s448, 8
        %s450 = scalar_lea.vmem [#allocation9], %s449
        %p451 = pneg %p136
        %p452 = pneg %p133
        %p453 = pneg %p157
        %p454 = pneg %p154
        %p455 = pneg %p178
        %p456 = pneg %p175
        %p457 = pneg %p199
        %p458 = pneg %p196
        %p459 = pneg %p220
        %p460 = pneg %p217
        %p461 = pneg %p241
        %p462 = pneg %p238
        %p463 = pneg %p262
        %p464 = pneg %p259
        %p465 = pneg %p290
        %p466 = pneg %p287
        %s467 = sand.u32 %s277, 1
        %s468 = scalar_lea.sflag [#allocation6], %s467
        %s469 = sand.u32 %s277, 1
        %s470 = smul.addr %s469, 64
        %s471 = scalar_lea.vmem [#allocation10], %s470
        %s472 = smul.u32 %s34, 8
        %s473 = ssub.s32 %s472, 1
        %p474 = scmp.gt.s32.totalorder %s473, 0
        %s475 = scalar_select %p474, %s473, 0
        %s476 = smul.u32 8, %s34
        %s477 = smul.u32 %s34, 8
        %s478 = sadd.s32 %s477, 8
        %p479 = scmp.lt.s32.totalorder %s478, 7
        %s480 = scalar_select %p479, %s478, 7
        %s481 = smul.u32 8, %s34
        %v483 = vld [vmem:[%s418] sm:$0xff]
        %v484 = vld [vmem:[%s418 + $0x8] sm:$0xff]
        %v485 = vld [vmem:[%s418 + $0x10] sm:$0xff]
        %v486 = vld [vmem:[%s418 + $0x18] sm:$0xff]
        %v487 = vld [vmem:[%s418 + $0x20] sm:$0xff]
        %v488 = vld [vmem:[%s418 + $0x28] sm:$0xff]
        %v489 = vld [vmem:[%s418 + $0x30] sm:$0xff]
        %v490 = vld [vmem:[%s418 + $0x38] sm:$0xff]
        %v491 = vpack.c.bf16 %v484, %v483
        %v492 = vpack.c.bf16 %v486, %v485
        %v493 = vpack.c.bf16 %v488, %v487
        %v494 = vpack.c.bf16 %v490, %v489
        %v495 = vld [vmem:[%s3] sm:$0xf]
        %v496 = vld [vmem:[%s3 + $0x4] sm:$0xf]
        %v497 = vld [vmem:[%s4] sm:$0x1]
        %v499 = vlaneseq
        %v500 = vshrl.u32 %v499, 7
        %v501 = vsub.s32 0, %v500
        %v502 = vrot.slane %v497, %v501
        %v506 = vunpack.c.l.b16 %v495
        %v507 = vunpack.c.l.b16 %v496
        %v508 = vpack.c.b16 %v507, %v506
        %vm510 = vcmask 130048
        %v512 = vsel %vm510, %v491, 0
        %v515 = vsel %vm510, %v492, 0
        %v518 = vsel %vm510, %v493, 0
        %v521 = vsel %vm510, %v494, 0
        %523 = vmatprep.subr.bf16.mxu0 0
        %524 = vmatpush1.bf16.msra.mxu0 0
        %525 = vmatprep.subr.bf16.mxu0 0
        %526 = vmatpush1.bf16.msra.mxu0 0
        %527 = vmatprep.subr.bf16.mxu0 0
        %528 = vmatpush1.bf16.msra.mxu0 0
        %529 = vmatprep.subr.bf16.mxu0 0
        %530 = vmatpush1.bf16.msra.mxu0 0
        %531 = vmatprep.subr.bf16.mxu0 0
        %532 = vmatpush1.bf16.msra.mxu0 0
        %533 = vmatprep.subr.bf16.mxu0 0
        %534 = vmatpush1.bf16.msra.mxu0 0
        %535 = vmatprep.subr.bf16.mxu0 0
        %536 = vmatpush1.bf16.msra.mxu0 0
        %537 = vmatprep.subr.bf16.mxu0 0
        %538 = vmatpush1.bf16.msra.mxu0 %v508
        %539 = vmatprep.subr.bf16.mxu0 0
        %540 = vmatpush2.bf16.msra.mxu0 0
        %541 = vmatprep.subr.bf16.mxu0 0
        %542 = vmatpush2.bf16.msra.mxu0 0
        %543 = vmatprep.subr.bf16.mxu0 0
        %544 = vmatpush2.bf16.msra.mxu0 0
        %545 = vmatprep.subr.bf16.mxu0 0
        %546 = vmatpush2.bf16.msra.mxu0 0
        %547 = vmatprep.subr.bf16.mxu0 0
        %548 = vmatpush2.bf16.msra.mxu0 0
        %549 = vmatprep.subr.bf16.mxu0 0
        %550 = vmatpush2.bf16.msra.mxu0 0
        %551 = vmatprep.subr.bf16.mxu0 0
        %552 = vmatpush2.bf16.msra.mxu0 0
        %553 = vmatprep.subr.bf16.mxu0 0
        %554 = vmatpush2.bf16.msra.mxu0 0
        %555 = vmatprep.mubr.bf16.mxu0 0
        %556 = vmatmul.mubr.bf16.gmra.mxu0 %v512
        %v557 = vpop.f32.mrf.mxu0
        %v558 = vadd.f32 %v502, %v557
        %v559 = vpop.f32.mrf.mxu0
        %v560 = vpop.f32.mrf.mxu0
        %v561 = vadd.f32 %v502, %v560
        %v562 = vpop.f32.mrf.mxu0
        %563 = vmatprep.mubr.bf16.mxu0 0
        %564 = vmatmul.mubr.bf16.gmra.mxu0 %v515
        %v565 = vpop.f32.mrf.mxu0
        %v566 = vadd.f32 %v502, %v565
        %v567 = vpop.f32.mrf.mxu0
        %v568 = vpop.f32.mrf.mxu0
        %v569 = vadd.f32 %v502, %v568
        %v570 = vpop.f32.mrf.mxu0
        %571 = vmatprep.mubr.bf16.mxu0 0
        %572 = vmatmul.mubr.bf16.gmra.mxu0 %v518
        %v573 = vpop.f32.mrf.mxu0
        %v574 = vadd.f32 %v502, %v573
        %v575 = vpop.f32.mrf.mxu0
        %v576 = vpop.f32.mrf.mxu0
        %v577 = vadd.f32 %v502, %v576
        %v578 = vpop.f32.mrf.mxu0
        %579 = vmatprep.mubr.bf16.mxu0 0
        %580 = vmatmul.mubr.bf16.gmra.mxu0 %v521
        %v581 = vpop.f32.mrf.mxu0
        %v582 = vadd.f32 %v502, %v581
        %v583 = vpop.f32.mrf.mxu0
        %v584 = vpop.f32.mrf.mxu0
        %v585 = vadd.f32 %v502, %v584
        %v586 = vpop.f32.mrf.mxu0
        %587 = vdwg.mxu0
        %v588 = vmax.f32 %v558, 0.0
        %v589 = vmax.f32 %v561, 0.0
        %v590 = vmax.f32 %v566, 0.0
        %v591 = vmax.f32 %v569, 0.0
        %v592 = vmax.f32 %v574, 0.0
        %v593 = vmax.f32 %v577, 0.0
        %v594 = vmax.f32 %v582, 0.0
        %v595 = vmax.f32 %v585, 0.0
        %v596 = vpack.c.bf16 %v588, %v588
        %v597 = vpack.c.bf16 %v589, %v589
        %v598 = vpack.c.bf16 %v590, %v590
        %v599 = vpack.c.bf16 %v591, %v591
        %v600 = vpack.c.bf16 %v592, %v592
        %v601 = vpack.c.bf16 %v593, %v593
        %v602 = vpack.c.bf16 %v594, %v594
        %v603 = vpack.c.bf16 %v595, %v595
        %s604 = scalar_lea.vmem [#allocation2], 4
        %vm605 = vcmask 27648
        %606 = vst.msk [vmem:[%s604] sm:$0xf] %vm605, %v596
        %607 = vst.msk [vmem:[%s604 + $0x4] sm:$0xf] %vm605, %v597
        %608 = vst.msk [vmem:[%s604 + $0x8] sm:$0xf] %vm605, %v598
        %609 = vst.msk [vmem:[%s604 + $0xc] sm:$0xf] %vm605, %v599
        %610 = vst.msk [vmem:[%s604 + $0x10] sm:$0xf] %vm605, %v600
        %611 = vst.msk [vmem:[%s604 + $0x14] sm:$0xf] %vm605, %v601
        %612 = vst.msk [vmem:[%s604 + $0x18] sm:$0xf] %vm605, %v602
        %613 = vst.msk [vmem:[%s604 + $0x1c] sm:$0xf] %vm605, %v603
        %p614 = scmp.eq.s32.totalorder %s34, 0
        // Predicated region
        $region69: #{tpu_custom_call.1} parent=55 // pred_check
          %p615 = pneg %p614
        $region70: #{tpu_custom_call.1} parent=55 // pred_check_branch
          %617 = sbr.rel (%p615) target = $region72
        $region71: #{tpu_custom_call.1} parent=55 // pred_region
          %618 = vst.msk [vmem:[#allocation2] sm:$0xf] %vm605, 0
        $region72: #{tpu_custom_call.1} parent=55 // pred_fallthru
          _
        %p619 = scmp.gt.s32.totalorder %s34, 0
        // Predicated region
        $region73: #{tpu_custom_call.1} parent=55 // pred_check
          %p620 = pneg %p619
        $region74: #{tpu_custom_call.1} parent=55 // pred_check_branch
          %622 = sbr.rel (%p620) target = $region76
        $region75: #{tpu_custom_call.1} parent=55 // pred_region
          %v623 = vld [vmem:[%s409] sm:$0xff]
          %v624 = vpack.c.bf16 %v623, %v623
          %v625 = vld [vmem:[%s3] sm:$0xf]
          %v626 = vld [vmem:[%s3 + $0x4] sm:$0xf]
          %v627 = vld [vmem:[%s4] sm:$0x1]
          %v629 = vlaneseq
          %v630 = vshrl.u32 %v629, 7
          %v631 = vsub.s32 0, %v630
          %v632 = vrot.slane %v627, %v631
          %v636 = vunpack.c.l.b16 %v625
          %v637 = vunpack.c.l.b16 %v626
          %v638 = vpack.c.b16 %v637, %v636
          %v641 = vsel %vm510, %v624, 0
          %643 = vmatprep.subr.bf16.mxu0 0
          %644 = vmatpush1.bf16.msra.mxu0 0
          %645 = vmatprep.subr.bf16.mxu0 0
          %646 = vmatpush1.bf16.msra.mxu0 0
          %647 = vmatprep.subr.bf16.mxu0 0
          %648 = vmatpush1.bf16.msra.mxu0 0
          %649 = vmatprep.subr.bf16.mxu0 0
          %650 = vmatpush1.bf16.msra.mxu0 0
          %651 = vmatprep.subr.bf16.mxu0 0
          %652 = vmatpush1.bf16.msra.mxu0 0
          %653 = vmatprep.subr.bf16.mxu0 0
          %654 = vmatpush1.bf16.msra.mxu0 0
          %655 = vmatprep.subr.bf16.mxu0 0
          %656 = vmatpush1.bf16.msra.mxu0 0
          %657 = vmatprep.subr.bf16.mxu0 0
          %658 = vmatpush1.bf16.msra.mxu0 %v638
          %659 = vmatprep.subr.bf16.mxu0 0
          %660 = vmatpush2.bf16.msra.mxu0 0
          %661 = vmatprep.subr.bf16.mxu0 0
          %662 = vmatpush2.bf16.msra.mxu0 0
          %663 = vmatprep.subr.bf16.mxu0 0
          %664 = vmatpush2.bf16.msra.mxu0 0
          %665 = vmatprep.subr.bf16.mxu0 0
          %666 = vmatpush2.bf16.msra.mxu0 0
          %667 = vmatprep.subr.bf16.mxu0 0
          %668 = vmatpush2.bf16.msra.mxu0 0
          %669 = vmatprep.subr.bf16.mxu0 0
          %670 = vmatpush2.bf16.msra.mxu0 0
          %671 = vmatprep.subr.bf16.mxu0 0
          %672 = vmatpush2.bf16.msra.mxu0 0
          %673 = vmatprep.subr.bf16.mxu0 0
          %674 = vmatpush2.bf16.msra.mxu0 0
          %675 = vmatprep.mubr.bf16.mxu0 0
          %676 = vmatmul.mubr.bf16.gmra.mxu0 %v641
          %v677 = vpop.f32.mrf.mxu0
          %v678 = vadd.f32 %v632, %v677
          %v679 = vpop.f32.mrf.mxu0
          %v680 = vpop.f32.mrf.mxu0
          %v681 = vpop.f32.mrf.mxu0
          %682 = vdwg.mxu0
          %v683 = vmax.f32 %v678, 0.0
          %v684 = vpack.c.bf16 %v683, %v683
          %685 = vst.msk [vmem:[#allocation2] sm:$0xf] %vm605, %v684
        $region76: #{tpu_custom_call.1} parent=55 // pred_fallthru
          _
        // Predicated region
        $region77: #{tpu_custom_call.1} parent=55 // pred_check
          %p686 = pneg %p614
        $region78: #{tpu_custom_call.1} parent=55 // pred_check_branch
          %688 = sbr.rel (%p686) target = $region80
        $region79: #{tpu_custom_call.1} parent=55 // pred_region
          %s689 = scalar_lea.vmem [#allocation2], 36
          %690 = vst.msk [vmem:[%s689] sm:$0xf] %vm605, 0
        $region80: #{tpu_custom_call.1} parent=55 // pred_fallthru
          _
        %p691 = scmp.lt.s32.totalorder %s34, 0
        // Predicated region
        $region81: #{tpu_custom_call.1} parent=55 // pred_check
          %p692 = pneg %p691
        $region82: #{tpu_custom_call.1} parent=55 // pred_check_branch
          %694 = sbr.rel (%p692) target = $region84
        $region83: #{tpu_custom_call.1} parent=55 // pred_region
          %v695 = vld [vmem:[%s427] sm:$0xff]
          %v696 = vpack.c.bf16 %v695, %v695
          %v697 = vld [vmem:[%s3] sm:$0xf]
          %v698 = vld [vmem:[%s3 + $0x4] sm:$0xf]
          %v699 = vld [vmem:[%s4] sm:$0x1]
          %v701 = vlaneseq
          %v702 = vshrl.u32 %v701, 7
          %v703 = vsub.s32 0, %v702
          %v704 = vrot.slane %v699, %v703
          %v708 = vunpack.c.l.b16 %v697
          %v709 = vunpack.c.l.b16 %v698
          %v710 = vpack.c.b16 %v709, %v708
          %v713 = vsel %vm510, %v696, 0
          %715 = vmatprep.subr.bf16.mxu0 0
          %716 = vmatpush1.bf16.msra.mxu0 0
          %717 = vmatprep.subr.bf16.mxu0 0
          %718 = vmatpush1.bf16.msra.mxu0 0
          %719 = vmatprep.subr.bf16.mxu0 0
          %720 = vmatpush1.bf16.msra.mxu0 0
          %721 = vmatprep.subr.bf16.mxu0 0
          %722 = vmatpush1.bf16.msra.mxu0 0
          %723 = vmatprep.subr.bf16.mxu0 0
          %724 = vmatpush1.bf16.msra.mxu0 0
          %725 = vmatprep.subr.bf16.mxu0 0
          %726 = vmatpush1.bf16.msra.mxu0 0
          %727 = vmatprep.subr.bf16.mxu0 0
          %728 = vmatpush1.bf16.msra.mxu0 0
          %729 = vmatprep.subr.bf16.mxu0 0
          %730 = vmatpush1.bf16.msra.mxu0 %v710
          %731 = vmatprep.subr.bf16.mxu0 0
          %732 = vmatpush2.bf16.msra.mxu0 0
          %733 = vmatprep.subr.bf16.mxu0 0
          %734 = vmatpush2.bf16.msra.mxu0 0
          %735 = vmatprep.subr.bf16.mxu0 0
          %736 = vmatpush2.bf16.msra.mxu0 0
          %737 = vmatprep.subr.bf16.mxu0 0
          %738 = vmatpush2.bf16.msra.mxu0 0
          %739 = vmatprep.subr.bf16.mxu0 0
          %740 = vmatpush2.bf16.msra.mxu0 0
          %741 = vmatprep.subr.bf16.mxu0 0
          %742 = vmatpush2.bf16.msra.mxu0 0
          %743 = vmatprep.subr.bf16.mxu0 0
          %744 = vmatpush2.bf16.msra.mxu0 0
          %745 = vmatprep.subr.bf16.mxu0 0
          %746 = vmatpush2.bf16.msra.mxu0 0
          %747 = vmatprep.mubr.bf16.mxu0 0
          %748 = vmatmul.mubr.bf16.gmra.mxu0 %v713
          %v749 = vpop.f32.mrf.mxu0
          %v750 = vadd.f32 %v704, %v749
          %v751 = vpop.f32.mrf.mxu0
          %v752 = vpop.f32.mrf.mxu0
          %v753 = vpop.f32.mrf.mxu0
          %754 = vdwg.mxu0
          %v755 = vmax.f32 %v750, 0.0
          %v756 = vpack.c.bf16 %v755, %v755
          %s757 = scalar_lea.vmem [#allocation2], 36
          %758 = vst.msk [vmem:[%s757] sm:$0xf] %vm605, %v756
        $region84: #{tpu_custom_call.1} parent=55 // pred_fallthru
          _
        %v759 = vld [vmem:[#allocation2] sm:$0xf]
        %v760 = vld [vmem:[#allocation2 + $0x4] sm:$0xf]
        %v761 = vld [vmem:[#allocation2 + $0x8] sm:$0xf]
        %v762 = vld [vmem:[#allocation2 + $0xc] sm:$0xf]
        %v763 = vld [vmem:[#allocation2 + $0x10] sm:$0xf]
        %v764 = vld [vmem:[#allocation2 + $0x14] sm:$0xf]
        %v765 = vld [vmem:[#allocation2 + $0x18] sm:$0xf]
        %v766 = vld [vmem:[#allocation2 + $0x1c] sm:$0xf]
        %v767 = vld [vmem:[%s604] sm:$0xf]
        %v768 = vld [vmem:[%s604 + $0x4] sm:$0xf]
        %v769 = vld [vmem:[%s604 + $0x8] sm:$0xf]
        %v770 = vld [vmem:[%s604 + $0xc] sm:$0xf]
        %v771 = vld [vmem:[%s604 + $0x10] sm:$0xf]
        %v772 = vld [vmem:[%s604 + $0x14] sm:$0xf]
        %v773 = vld [vmem:[%s604 + $0x18] sm:$0xf]
        %v774 = vld [vmem:[%s604 + $0x1c] sm:$0xf]
        %s775 = scalar_lea.vmem [#allocation2], 8
        %v776 = vld [vmem:[%s775] sm:$0xf]
        %v777 = vld [vmem:[%s775 + $0x4] sm:$0xf]
        %v778 = vld [vmem:[%s775 + $0x8] sm:$0xf]
        %v779 = vld [vmem:[%s775 + $0xc] sm:$0xf]
        %v780 = vld [vmem:[%s775 + $0x10] sm:$0xf]
        %v781 = vld [vmem:[%s775 + $0x14] sm:$0xf]
        %v782 = vld [vmem:[%s775 + $0x18] sm:$0xf]
        %v783 = vld [vmem:[%s775 + $0x1c] sm:$0xf]
        %v792 = vunpack.c.l.b16 %v767
        %v793 = vunpack.c.l.b16 %v768
        %v794 = vunpack.c.l.b16 %v769
        %v795 = vunpack.c.l.b16 %v770
        %v796 = vunpack.c.l.b16 %v771
        %v797 = vunpack.c.l.b16 %v772
        %v798 = vunpack.c.l.b16 %v773
        %v799 = vunpack.c.l.b16 %v774
        %v800 = vpack.c.b16 %v792, %v792
        %v801 = vpack.c.b16 %v793, %v793
        %v802 = vpack.c.b16 %v794, %v794
        %v803 = vpack.c.b16 %v795, %v795
        %v804 = vpack.c.b16 %v796, %v796
        %v805 = vpack.c.b16 %v797, %v797
        %v806 = vpack.c.b16 %v798, %v798
        %v807 = vpack.c.b16 %v799, %v799
        %808 = vrot.lane.b32.xlu0 %v800, 4
        %v809 = vpop.permute.xlu0 %808
        %810 = vrot.lane.b32.xlu0 %v801, 4
        %v811 = vpop.permute.xlu0 %810
        %812 = vrot.lane.b32.xlu0 %v802, 4
        %v813 = vpop.permute.xlu0 %812
        %814 = vrot.lane.b32.xlu0 %v803, 4
        %v815 = vpop.permute.xlu0 %814
        %816 = vrot.lane.b32.xlu0 %v804, 4
        %v817 = vpop.permute.xlu0 %816
        %818 = vrot.lane.b32.xlu0 %v805, 4
        %v819 = vpop.permute.xlu0 %818
        %820 = vrot.lane.b32.xlu0 %v806, 4
        %v821 = vpop.permute.xlu0 %820
        %822 = vrot.lane.b32.xlu0 %v807, 4
        %v823 = vpop.permute.xlu0 %822
        %v832 = vunpack.c.l.b16 %v776
        %v833 = vunpack.c.l.b16 %v777
        %v834 = vunpack.c.l.b16 %v778
        %v835 = vunpack.c.l.b16 %v779
        %v836 = vunpack.c.l.b16 %v780
        %v837 = vunpack.c.l.b16 %v781
        %v838 = vunpack.c.l.b16 %v782
        %v839 = vunpack.c.l.b16 %v783
        %v840 = vpack.c.b16 %v832, %v832
        %v841 = vpack.c.b16 %v833, %v833
        %v842 = vpack.c.b16 %v834, %v834
        %v843 = vpack.c.b16 %v835, %v835
        %v844 = vpack.c.b16 %v836, %v836
        %v845 = vpack.c.b16 %v837, %v837
        %v846 = vpack.c.b16 %v838, %v838
        %v847 = vpack.c.b16 %v839, %v839
        %848 = vrot.lane.b32.xlu0 %v840, 8
        %v849 = vpop.permute.xlu0 %848
        %850 = vrot.lane.b32.xlu0 %v841, 8
        %v851 = vpop.permute.xlu0 %850
        %852 = vrot.lane.b32.xlu0 %v842, 8
        %v853 = vpop.permute.xlu0 %852
        %854 = vrot.lane.b32.xlu0 %v843, 8
        %v855 = vpop.permute.xlu0 %854
        %856 = vrot.lane.b32.xlu0 %v844, 8
        %v857 = vpop.permute.xlu0 %856
        %858 = vrot.lane.b32.xlu0 %v845, 8
        %v859 = vpop.permute.xlu0 %858
        %860 = vrot.lane.b32.xlu0 %v846, 8
        %v861 = vpop.permute.xlu0 %860
        %862 = vrot.lane.b32.xlu0 %v847, 8
        %v863 = vpop.permute.xlu0 %862
        %vm864 = vcmask 31744
        %v867 = vsel %vm864, %v759, %v809
        %v870 = vsel %vm864, %v760, %v811
        %v873 = vsel %vm864, %v761, %v813
        %v876 = vsel %vm864, %v762, %v815
        %v879 = vsel %vm864, %v763, %v817
        %v882 = vsel %vm864, %v764, %v819
        %v885 = vsel %vm864, %v765, %v821
        %v888 = vsel %vm864, %v766, %v823
        %vm889 = vcmask 64512
        %v891 = vsel %vm889, %v867, %v849
        %v893 = vsel %vm889, %v870, %v851
        %v895 = vsel %vm889, %v873, %v853
        %v897 = vsel %vm889, %v876, %v855
        %v899 = vsel %vm889, %v879, %v857
        %v901 = vsel %vm889, %v882, %v859
        %v903 = vsel %vm889, %v885, %v861
        %v905 = vsel %vm889, %v888, %v863
        %v914 = vunpack.c.l.b16 %v891
        %v915 = vunpack.c.l.b16 %v893
        %v916 = vunpack.c.l.b16 %v895
        %v917 = vunpack.c.l.b16 %v897
        %v918 = vunpack.c.l.b16 %v899
        %v919 = vunpack.c.l.b16 %v901
        %v920 = vunpack.c.l.b16 %v903
        %v921 = vunpack.c.l.b16 %v905
        %v922 = vpack.c.b16 %v914, %v914
        %v923 = vpack.c.b16 %v915, %v915
        %v924 = vpack.c.b16 %v916, %v916
        %v925 = vpack.c.b16 %v917, %v917
        %v926 = vpack.c.b16 %v918, %v918
        %v927 = vpack.c.b16 %v919, %v919
        %v928 = vpack.c.b16 %v920, %v920
        %v929 = vpack.c.b16 %v921, %v921
        %930 = vrot.lane.b32.xlu0 %v922, 12
        %v931 = vpop.permute.xlu0 %930
        %932 = vrot.lane.b32.xlu0 %v923, 12
        %v933 = vpop.permute.xlu0 %932
        %934 = vrot.lane.b32.xlu0 %v924, 12
        %v935 = vpop.permute.xlu0 %934
        %936 = vrot.lane.b32.xlu0 %v925, 12
        %v937 = vpop.permute.xlu0 %936
        %938 = vrot.lane.b32.xlu0 %v926, 12
        %v939 = vpop.permute.xlu0 %938
        %940 = vrot.lane.b32.xlu0 %v927, 12
        %v941 = vpop.permute.xlu0 %940
        %942 = vrot.lane.b32.xlu0 %v928, 12
        %v943 = vpop.permute.xlu0 %942
        %944 = vrot.lane.b32.xlu0 %v929, 12
        %v945 = vpop.permute.xlu0 %944
        %vm954 = vcmask 191584
        %955 = vst.msk [vmem:[#allocation3] sm:$0xf] %vm954, %v931
        %956 = vst.msk [vmem:[#allocation3 + $0x4] sm:$0xf] %vm954, %v933
        %957 = vst.msk [vmem:[#allocation3 + $0x8] sm:$0xf] %vm954, %v935
        %958 = vst.msk [vmem:[#allocation3 + $0xc] sm:$0xf] %vm954, %v937
        %959 = vst.msk [vmem:[#allocation3 + $0x10] sm:$0xf] %vm954, %v939
        %960 = vst.msk [vmem:[#allocation3 + $0x14] sm:$0xf] %vm954, %v941
        %961 = vst.msk [vmem:[#allocation3 + $0x18] sm:$0xf] %vm954, %v943
        %962 = vst.msk [vmem:[#allocation3 + $0x1c] sm:$0xf] %vm954, %v945
        %vm963 = vcmask 90112
        %vm964 = vsmask.f32 256
        %vm965 = vmand %vm963, %vm964
        %v966 = vld [vmem:[#allocation3] sm:$0x1]
        %v967 = vsel %vm965, 0, %v966
        %968 = vst [vmem:[#allocation3] sm:$0x1] %v967
        %v969 = vld [vmem:[#allocation3 + $0x4] sm:$0x1]
        %v970 = vsel %vm965, 0, %v969
        %971 = vst [vmem:[#allocation3 + $0x4] sm:$0x1] %v970
        %v972 = vld [vmem:[#allocation3 + $0x8] sm:$0x1]
        %v973 = vsel %vm965, 0, %v972
        %974 = vst [vmem:[#allocation3 + $0x8] sm:$0x1] %v973
        %v975 = vld [vmem:[#allocation3 + $0xc] sm:$0x1]
        %v976 = vsel %vm965, 0, %v975
        %977 = vst [vmem:[#allocation3 + $0xc] sm:$0x1] %v976
        %v978 = vld [vmem:[#allocation3 + $0x10] sm:$0x1]
        %v979 = vsel %vm965, 0, %v978
        %980 = vst [vmem:[#allocation3 + $0x10] sm:$0x1] %v979
        %v981 = vld [vmem:[#allocation3 + $0x14] sm:$0x1]
        %v982 = vsel %vm965, 0, %v981
        %983 = vst [vmem:[#allocation3 + $0x14] sm:$0x1] %v982
        %v984 = vld [vmem:[#allocation3 + $0x18] sm:$0x1]
        %v985 = vsel %vm965, 0, %v984
        %986 = vst [vmem:[#allocation3 + $0x18] sm:$0x1] %v985
        %v987 = vld [vmem:[#allocation3 + $0x1c] sm:$0x1]
        %v988 = vsel %vm965, 0, %v987
        %989 = vst [vmem:[#allocation3 + $0x1c] sm:$0x1] %v988
        %v990 = vld [vmem:[#allocation2] sm:$0xf]
        %v991 = vld [vmem:[#allocation2 + $0x4] sm:$0xf]
        %v992 = vld [vmem:[#allocation2 + $0x8] sm:$0xf]
        %v993 = vld [vmem:[#allocation2 + $0xc] sm:$0xf]
        %v994 = vld [vmem:[#allocation2 + $0x10] sm:$0xf]
        %v995 = vld [vmem:[#allocation2 + $0x14] sm:$0xf]
        %v996 = vld [vmem:[#allocation2 + $0x18] sm:$0xf]
        %v997 = vld [vmem:[#allocation2 + $0x1c] sm:$0xf]
        %v998 = vld [vmem:[%s604] sm:$0xf]
        %v999 = vld [vmem:[%s604 + $0x4] sm:$0xf]
        %v1000 = vld [vmem:[%s604 + $0x8] sm:$0xf]
        %v1001 = vld [vmem:[%s604 + $0xc] sm:$0xf]
        %v1002 = vld [vmem:[%s604 + $0x10] sm:$0xf]
        %v1003 = vld [vmem:[%s604 + $0x14] sm:$0xf]
        %v1004 = vld [vmem:[%s604 + $0x18] sm:$0xf]
        %v1005 = vld [vmem:[%s604 + $0x1c] sm:$0xf]
        %v1006 = vld [vmem:[%s775] sm:$0xf]
        %v1007 = vld [vmem:[%s775 + $0x4] sm:$0xf]
        %v1008 = vld [vmem:[%s775 + $0x8] sm:$0xf]
        %v1009 = vld [vmem:[%s775 + $0xc] sm:$0xf]
        %v1010 = vld [vmem:[%s775 + $0x10] sm:$0xf]
        %v1011 = vld [vmem:[%s775 + $0x14] sm:$0xf]
        %v1012 = vld [vmem:[%s775 + $0x18] sm:$0xf]
        %v1013 = vld [vmem:[%s775 + $0x1c] sm:$0xf]
        %v1022 = vunpack.c.l.b16 %v998
        %v1023 = vunpack.c.l.b16 %v999
        %v1024 = vunpack.c.l.b16 %v1000
        %v1025 = vunpack.c.l.b16 %v1001
        %v1026 = vunpack.c.l.b16 %v1002
        %v1027 = vunpack.c.l.b16 %v1003
        %v1028 = vunpack.c.l.b16 %v1004
        %v1029 = vunpack.c.l.b16 %v1005
        %v1030 = vpack.c.b16 %v1022, %v1022
        %v1031 = vpack.c.b16 %v1023, %v1023
        %v1032 = vpack.c.b16 %v1024, %v1024
        %v1033 = vpack.c.b16 %v1025, %v1025
        %v1034 = vpack.c.b16 %v1026, %v1026
        %v1035 = vpack.c.b16 %v1027, %v1027
        %v1036 = vpack.c.b16 %v1028, %v1028
        %v1037 = vpack.c.b16 %v1029, %v1029
        %1038 = vrot.lane.b32.xlu0 %v1030, 4
        %v1039 = vpop.permute.xlu0 %1038
        %1040 = vrot.lane.b32.xlu0 %v1031, 4
        %v1041 = vpop.permute.xlu0 %1040
        %1042 = vrot.lane.b32.xlu0 %v1032, 4
        %v1043 = vpop.permute.xlu0 %1042
        %1044 = vrot.lane.b32.xlu0 %v1033, 4
        %v1045 = vpop.permute.xlu0 %1044
        %1046 = vrot.lane.b32.xlu0 %v1034, 4
        %v1047 = vpop.permute.xlu0 %1046
        %1048 = vrot.lane.b32.xlu0 %v1035, 4
        %v1049 = vpop.permute.xlu0 %1048
        %1050 = vrot.lane.b32.xlu0 %v1036, 4
        %v1051 = vpop.permute.xlu0 %1050
        %1052 = vrot.lane.b32.xlu0 %v1037, 4
        %v1053 = vpop.permute.xlu0 %1052
        %v1062 = vunpack.c.l.b16 %v1006
        %v1063 = vunpack.c.l.b16 %v1007
        %v1064 = vunpack.c.l.b16 %v1008
        %v1065 = vunpack.c.l.b16 %v1009
        %v1066 = vunpack.c.l.b16 %v1010
        %v1067 = vunpack.c.l.b16 %v1011
        %v1068 = vunpack.c.l.b16 %v1012
        %v1069 = vunpack.c.l.b16 %v1013
        %v1070 = vpack.c.b16 %v1062, %v1062
        %v1071 = vpack.c.b16 %v1063, %v1063
        %v1072 = vpack.c.b16 %v1064, %v1064
        %v1073 = vpack.c.b16 %v1065, %v1065
        %v1074 = vpack.c.b16 %v1066, %v1066
        %v1075 = vpack.c.b16 %v1067, %v1067
        %v1076 = vpack.c.b16 %v1068, %v1068
        %v1077 = vpack.c.b16 %v1069, %v1069
        %1078 = vrot.lane.b32.xlu0 %v1070, 8
        %v1079 = vpop.permute.xlu0 %1078
        %1080 = vrot.lane.b32.xlu0 %v1071, 8
        %v1081 = vpop.permute.xlu0 %1080
        %1082 = vrot.lane.b32.xlu0 %v1072, 8
        %v1083 = vpop.permute.xlu0 %1082
        %1084 = vrot.lane.b32.xlu0 %v1073, 8
        %v1085 = vpop.permute.xlu0 %1084
        %1086 = vrot.lane.b32.xlu0 %v1074, 8
        %v1087 = vpop.permute.xlu0 %1086
        %1088 = vrot.lane.b32.xlu0 %v1075, 8
        %v1089 = vpop.permute.xlu0 %1088
        %1090 = vrot.lane.b32.xlu0 %v1076, 8
        %v1091 = vpop.permute.xlu0 %1090
        %1092 = vrot.lane.b32.xlu0 %v1077, 8
        %v1093 = vpop.permute.xlu0 %1092
        %v1096 = vsel %vm864, %v990, %v1039
        %v1099 = vsel %vm864, %v991, %v1041
        %v1102 = vsel %vm864, %v992, %v1043
        %v1105 = vsel %vm864, %v993, %v1045
        %v1108 = vsel %vm864, %v994, %v1047
        %v1111 = vsel %vm864, %v995, %v1049
        %v1114 = vsel %vm864, %v996, %v1051
        %v1117 = vsel %vm864, %v997, %v1053
        %v1119 = vsel %vm889, %v1096, %v1079
        %v1121 = vsel %vm889, %v1099, %v1081
        %v1123 = vsel %vm889, %v1102, %v1083
        %v1125 = vsel %vm889, %v1105, %v1085
        %v1127 = vsel %vm889, %v1108, %v1087
        %v1129 = vsel %vm889, %v1111, %v1089
        %v1131 = vsel %vm889, %v1114, %v1091
        %v1133 = vsel %vm889, %v1117, %v1093
        %v1142 = vunpack.c.l.b16 %v1119
        %v1143 = vunpack.c.l.b16 %v1121
        %v1144 = vunpack.c.l.b16 %v1123
        %v1145 = vunpack.c.l.b16 %v1125
        %v1146 = vunpack.c.l.b16 %v1127
        %v1147 = vunpack.c.l.b16 %v1129
        %v1148 = vunpack.c.l.b16 %v1131
        %v1149 = vunpack.c.l.b16 %v1133
        %v1150 = vpack.c.b16 %v1142, %v1142
        %v1151 = vpack.c.b16 %v1143, %v1143
        %v1152 = vpack.c.b16 %v1144, %v1144
        %v1153 = vpack.c.b16 %v1145, %v1145
        %v1154 = vpack.c.b16 %v1146, %v1146
        %v1155 = vpack.c.b16 %v1147, %v1147
        %v1156 = vpack.c.b16 %v1148, %v1148
        %v1157 = vpack.c.b16 %v1149, %v1149
        %v1159 = vshrl.u32 %v1150, 16
        %v1161 = vrot.slane %v1159, 7
        %v1162 = vshll.u32 %v1150, 16
        %v1164 = vor.u32 %v1161, %v1162
        %v1166 = vshrl.u32 %v1151, 16
        %v1168 = vrot.slane %v1166, 7
        %v1169 = vshll.u32 %v1151, 16
        %v1171 = vor.u32 %v1168, %v1169
        %v1173 = vshrl.u32 %v1152, 16
        %v1175 = vrot.slane %v1173, 7
        %v1176 = vshll.u32 %v1152, 16
        %v1178 = vor.u32 %v1175, %v1176
        %v1180 = vshrl.u32 %v1153, 16
        %v1182 = vrot.slane %v1180, 7
        %v1183 = vshll.u32 %v1153, 16
        %v1185 = vor.u32 %v1182, %v1183
        %v1187 = vshrl.u32 %v1154, 16
        %v1189 = vrot.slane %v1187, 7
        %v1190 = vshll.u32 %v1154, 16
        %v1192 = vor.u32 %v1189, %v1190
        %v1194 = vshrl.u32 %v1155, 16
        %v1196 = vrot.slane %v1194, 7
        %v1197 = vshll.u32 %v1155, 16
        %v1199 = vor.u32 %v1196, %v1197
        %v1201 = vshrl.u32 %v1156, 16
        %v1203 = vrot.slane %v1201, 7
        %v1204 = vshll.u32 %v1156, 16
        %v1206 = vor.u32 %v1203, %v1204
        %v1208 = vshrl.u32 %v1157, 16
        %v1210 = vrot.slane %v1208, 7
        %v1211 = vshll.u32 %v1157, 16
        %v1213 = vor.u32 %v1210, %v1211
        %vm1222 = vcmask 93184
        %vm1223 = vsmask.f32 7938
        %vm1224 = vmand %vm1222, %vm1223
        %v1225 = vld [vmem:[#allocation3] sm:$0xf]
        %v1226 = vsel %vm1224, %v1164, %v1225
        %1227 = vst [vmem:[#allocation3] sm:$0xf] %v1226
        %v1228 = vld [vmem:[#allocation3 + $0x4] sm:$0xf]
        %v1229 = vsel %vm1224, %v1171, %v1228
        %1230 = vst [vmem:[#allocation3 + $0x4] sm:$0xf] %v1229
        %v1231 = vld [vmem:[#allocation3 + $0x8] sm:$0xf]
        %v1232 = vsel %vm1224, %v1178, %v1231
        %1233 = vst [vmem:[#allocation3 + $0x8] sm:$0xf] %v1232
        %v1234 = vld [vmem:[#allocation3 + $0xc] sm:$0xf]
        %v1235 = vsel %vm1224, %v1185, %v1234
        %1236 = vst [vmem:[#allocation3 + $0xc] sm:$0xf] %v1235
        %v1237 = vld [vmem:[#allocation3 + $0x10] sm:$0xf]
        %v1238 = vsel %vm1224, %v1192, %v1237
        %1239 = vst [vmem:[#allocation3 + $0x10] sm:$0xf] %v1238
        %v1240 = vld [vmem:[#allocation3 + $0x14] sm:$0xf]
        %v1241 = vsel %vm1224, %v1199, %v1240
        %1242 = vst [vmem:[#allocation3 + $0x14] sm:$0xf] %v1241
        %v1243 = vld [vmem:[#allocation3 + $0x18] sm:$0xf]
        %v1244 = vsel %vm1224, %v1206, %v1243
        %1245 = vst [vmem:[#allocation3 + $0x18] sm:$0xf] %v1244
        %v1246 = vld [vmem:[#allocation3 + $0x1c] sm:$0xf]
        %v1247 = vsel %vm1224, %v1213, %v1246
        %1248 = vst [vmem:[#allocation3 + $0x1c] sm:$0xf] %v1247
        %vm1249 = vcmask 289987
        %vm1250 = vsmask.f32 7950
        %vm1251 = vmand %vm1249, %vm1250
        %v1252 = vld [vmem:[#allocation3] sm:$0x8]
        %v1253 = vsel %vm1251, 0, %v1252
        %1254 = vst [vmem:[#allocation3] sm:$0x8] %v1253
        %v1255 = vld [vmem:[#allocation3 + $0x4] sm:$0x8]
        %v1256 = vsel %vm1251, 0, %v1255
        %1257 = vst [vmem:[#allocation3 + $0x4] sm:$0x8] %v1256
        %v1258 = vld [vmem:[#allocation3 + $0x8] sm:$0x8]
        %v1259 = vsel %vm1251, 0, %v1258
        %1260 = vst [vmem:[#allocation3 + $0x8] sm:$0x8] %v1259
        %v1261 = vld [vmem:[#allocation3 + $0xc] sm:$0x8]
        %v1262 = vsel %vm1251, 0, %v1261
        %1263 = vst [vmem:[#allocation3 + $0xc] sm:$0x8] %v1262
        %v1264 = vld [vmem:[#allocation3 + $0x10] sm:$0x8]
        %v1265 = vsel %vm1251, 0, %v1264
        %1266 = vst [vmem:[#allocation3 + $0x10] sm:$0x8] %v1265
        %v1267 = vld [vmem:[#allocation3 + $0x14] sm:$0x8]
        %v1268 = vsel %vm1251, 0, %v1267
        %1269 = vst [vmem:[#allocation3 + $0x14] sm:$0x8] %v1268
        %v1270 = vld [vmem:[#allocation3 + $0x18] sm:$0x8]
        %v1271 = vsel %vm1251, 0, %v1270
        %1272 = vst [vmem:[#allocation3 + $0x18] sm:$0x8] %v1271
        %v1273 = vld [vmem:[#allocation3 + $0x1c] sm:$0x8]
        %v1274 = vsel %vm1251, 0, %v1273
        %1275 = vst [vmem:[#allocation3 + $0x1c] sm:$0x8] %v1274
        %v1276 = vld [vmem:[#allocation2] sm:$0xf]
        %v1277 = vld [vmem:[#allocation2 + $0x4] sm:$0xf]
        %v1278 = vld [vmem:[#allocation2 + $0x8] sm:$0xf]
        %v1279 = vld [vmem:[#allocation2 + $0xc] sm:$0xf]
        %v1280 = vld [vmem:[#allocation2 + $0x10] sm:$0xf]
        %v1281 = vld [vmem:[#allocation2 + $0x14] sm:$0xf]
        %v1282 = vld [vmem:[#allocation2 + $0x18] sm:$0xf]
        %v1283 = vld [vmem:[#allocation2 + $0x1c] sm:$0xf]
        %v1284 = vld [vmem:[%s604] sm:$0xf]
        %v1285 = vld [vmem:[%s604 + $0x4] sm:$0xf]
        %v1286 = vld [vmem:[%s604 + $0x8] sm:$0xf]
        %v1287 = vld [vmem:[%s604 + $0xc] sm:$0xf]
        %v1288 = vld [vmem:[%s604 + $0x10] sm:$0xf]
        %v1289 = vld [vmem:[%s604 + $0x14] sm:$0xf]
        %v1290 = vld [vmem:[%s604 + $0x18] sm:$0xf]
        %v1291 = vld [vmem:[%s604 + $0x1c] sm:$0xf]
        %v1292 = vld [vmem:[%s775] sm:$0xf]
        %v1293 = vld [vmem:[%s775 + $0x4] sm:$0xf]
        %v1294 = vld [vmem:[%s775 + $0x8] sm:$0xf]
        %v1295 = vld [vmem:[%s775 + $0xc] sm:$0xf]
        %v1296 = vld [vmem:[%s775 + $0x10] sm:$0xf]
        %v1297 = vld [vmem:[%s775 + $0x14] sm:$0xf]
        %v1298 = vld [vmem:[%s775 + $0x18] sm:$0xf]
        %v1299 = vld [vmem:[%s775 + $0x1c] sm:$0xf]
        %v1308 = vunpack.c.l.b16 %v1284
        %v1309 = vunpack.c.l.b16 %v1285
        %v1310 = vunpack.c.l.b16 %v1286
        %v1311 = vunpack.c.l.b16 %v1287
        %v1312 = vunpack.c.l.b16 %v1288
        %v1313 = vunpack.c.l.b16 %v1289
        %v1314 = vunpack.c.l.b16 %v1290
        %v1315 = vunpack.c.l.b16 %v1291
        %v1316 = vpack.c.b16 %v1308, %v1308
        %v1317 = vpack.c.b16 %v1309, %v1309
        %v1318 = vpack.c.b16 %v1310, %v1310
        %v1319 = vpack.c.b16 %v1311, %v1311
        %v1320 = vpack.c.b16 %v1312, %v1312
        %v1321 = vpack.c.b16 %v1313, %v1313
        %v1322 = vpack.c.b16 %v1314, %v1314
        %v1323 = vpack.c.b16 %v1315, %v1315
        %1324 = vrot.lane.b32.xlu0 %v1316, 4
        %v1325 = vpop.permute.xlu0 %1324
        %1326 = vrot.lane.b32.xlu0 %v1317, 4
        %v1327 = vpop.permute.xlu0 %1326
        %1328 = vrot.lane.b32.xlu0 %v1318, 4
        %v1329 = vpop.permute.xlu0 %1328
        %1330 = vrot.lane.b32.xlu0 %v1319, 4
        %v1331 = vpop.permute.xlu0 %1330
        %1332 = vrot.lane.b32.xlu0 %v1320, 4
        %v1333 = vpop.permute.xlu0 %1332
        %1334 = vrot.lane.b32.xlu0 %v1321, 4
        %v1335 = vpop.permute.xlu0 %1334
        %1336 = vrot.lane.b32.xlu0 %v1322, 4
        %v1337 = vpop.permute.xlu0 %1336
        %1338 = vrot.lane.b32.xlu0 %v1323, 4
        %v1339 = vpop.permute.xlu0 %1338
        %v1348 = vunpack.c.l.b16 %v1292
        %v1349 = vunpack.c.l.b16 %v1293
        %v1350 = vunpack.c.l.b16 %v1294
        %v1351 = vunpack.c.l.b16 %v1295
        %v1352 = vunpack.c.l.b16 %v1296
        %v1353 = vunpack.c.l.b16 %v1297
        %v1354 = vunpack.c.l.b16 %v1298
        %v1355 = vunpack.c.l.b16 %v1299
        %v1356 = vpack.c.b16 %v1348, %v1348
        %v1357 = vpack.c.b16 %v1349, %v1349
        %v1358 = vpack.c.b16 %v1350, %v1350
        %v1359 = vpack.c.b16 %v1351, %v1351
        %v1360 = vpack.c.b16 %v1352, %v1352
        %v1361 = vpack.c.b16 %v1353, %v1353
        %v1362 = vpack.c.b16 %v1354, %v1354
        %v1363 = vpack.c.b16 %v1355, %v1355
        %1364 = vrot.lane.b32.xlu0 %v1356, 8
        %v1365 = vpop.permute.xlu0 %1364
        %1366 = vrot.lane.b32.xlu0 %v1357, 8
        %v1367 = vpop.permute.xlu0 %1366
        %1368 = vrot.lane.b32.xlu0 %v1358, 8
        %v1369 = vpop.permute.xlu0 %1368
        %1370 = vrot.lane.b32.xlu0 %v1359, 8
        %v1371 = vpop.permute.xlu0 %1370
        %1372 = vrot.lane.b32.xlu0 %v1360, 8
        %v1373 = vpop.permute.xlu0 %1372
        %1374 = vrot.lane.b32.xlu0 %v1361, 8
        %v1375 = vpop.permute.xlu0 %1374
        %1376 = vrot.lane.b32.xlu0 %v1362, 8
        %v1377 = vpop.permute.xlu0 %1376
        %1378 = vrot.lane.b32.xlu0 %v1363, 8
        %v1379 = vpop.permute.xlu0 %1378
        %v1382 = vsel %vm864, %v1276, %v1325
        %v1385 = vsel %vm864, %v1277, %v1327
        %v1388 = vsel %vm864, %v1278, %v1329
        %v1391 = vsel %vm864, %v1279, %v1331
        %v1394 = vsel %vm864, %v1280, %v1333
        %v1397 = vsel %vm864, %v1281, %v1335
        %v1400 = vsel %vm864, %v1282, %v1337
        %v1403 = vsel %vm864, %v1283, %v1339
        %v1405 = vsel %vm889, %v1382, %v1365
        %v1407 = vsel %vm889, %v1385, %v1367
        %v1409 = vsel %vm889, %v1388, %v1369
        %v1411 = vsel %vm889, %v1391, %v1371
        %v1413 = vsel %vm889, %v1394, %v1373
        %v1415 = vsel %vm889, %v1397, %v1375
        %v1417 = vsel %vm889, %v1400, %v1377
        %v1419 = vsel %vm889, %v1403, %v1379
        %v1428 = vunpack.c.l.b16 %v1405
        %v1429 = vunpack.c.l.b16 %v1407
        %v1430 = vunpack.c.l.b16 %v1409
        %v1431 = vunpack.c.l.b16 %v1411
        %v1432 = vunpack.c.l.b16 %v1413
        %v1433 = vunpack.c.l.b16 %v1415
        %v1434 = vunpack.c.l.b16 %v1417
        %v1435 = vunpack.c.l.b16 %v1419
        %v1436 = vpack.c.b16 %v1428, %v1428
        %v1437 = vpack.c.b16 %v1429, %v1429
        %v1438 = vpack.c.b16 %v1430, %v1430
        %v1439 = vpack.c.b16 %v1431, %v1431
        %v1440 = vpack.c.b16 %v1432, %v1432
        %v1441 = vpack.c.b16 %v1433, %v1433
        %v1442 = vpack.c.b16 %v1434, %v1434
        %v1443 = vpack.c.b16 %v1435, %v1435
        %v1445 = vshrl.u32 %v1436, 16
        %v1447 = vrot.slane %v1445, 4
        %v1448 = vshll.u32 %v1436, 16
        %v1450 = vrot.slane %v1448, 5
        %v1451 = vor.u32 %v1447, %v1450
        %v1452 = vrot.slane %v1451, 4
        %v1454 = vshrl.u32 %v1437, 16
        %v1456 = vrot.slane %v1454, 4
        %v1457 = vshll.u32 %v1437, 16
        %v1459 = vrot.slane %v1457, 5
        %v1460 = vor.u32 %v1456, %v1459
        %v1461 = vrot.slane %v1460, 4
        %v1463 = vshrl.u32 %v1438, 16
        %v1465 = vrot.slane %v1463, 4
        %v1466 = vshll.u32 %v1438, 16
        %v1468 = vrot.slane %v1466, 5
        %v1469 = vor.u32 %v1465, %v1468
        %v1470 = vrot.slane %v1469, 4
        %v1472 = vshrl.u32 %v1439, 16
        %v1474 = vrot.slane %v1472, 4
        %v1475 = vshll.u32 %v1439, 16
        %v1477 = vrot.slane %v1475, 5
        %v1478 = vor.u32 %v1474, %v1477
        %v1479 = vrot.slane %v1478, 4
        %v1481 = vshrl.u32 %v1440, 16
        %v1483 = vrot.slane %v1481, 4
        %v1484 = vshll.u32 %v1440, 16
        %v1486 = vrot.slane %v1484, 5
        %v1487 = vor.u32 %v1483, %v1486
        %v1488 = vrot.slane %v1487, 4
        %v1490 = vshrl.u32 %v1441, 16
        %v1492 = vrot.slane %v1490, 4
        %v1493 = vshll.u32 %v1441, 16
        %v1495 = vrot.slane %v1493, 5
        %v1496 = vor.u32 %v1492, %v1495
        %v1497 = vrot.slane %v1496, 4
        %v1499 = vshrl.u32 %v1442, 16
        %v1501 = vrot.slane %v1499, 4
        %v1502 = vshll.u32 %v1442, 16
        %v1504 = vrot.slane %v1502, 5
        %v1505 = vor.u32 %v1501, %v1504
        %v1506 = vrot.slane %v1505, 4
        %v1508 = vshrl.u32 %v1443, 16
        %v1510 = vrot.slane %v1508, 4
        %v1511 = vshll.u32 %v1443, 16
        %v1513 = vrot.slane %v1511, 5
        %v1514 = vor.u32 %v1510, %v1513
        %v1515 = vrot.slane %v1514, 4
        %1516 = vrot.lane.b32.xlu0 %v1452, 24
        %v1517 = vpop.permute.xlu0 %1516
        %1518 = vrot.lane.b32.xlu0 %v1461, 24
        %v1519 = vpop.permute.xlu0 %1518
        %1520 = vrot.lane.b32.xlu0 %v1470, 24
        %v1521 = vpop.permute.xlu0 %1520
        %1522 = vrot.lane.b32.xlu0 %v1479, 24
        %v1523 = vpop.permute.xlu0 %1522
        %1524 = vrot.lane.b32.xlu0 %v1488, 24
        %v1525 = vpop.permute.xlu0 %1524
        %1526 = vrot.lane.b32.xlu0 %v1497, 24
        %v1527 = vpop.permute.xlu0 %1526
        %1528 = vrot.lane.b32.xlu0 %v1506, 24
        %v1529 = vpop.permute.xlu0 %1528
        %1530 = vrot.lane.b32.xlu0 %v1515, 24
        %v1531 = vpop.permute.xlu0 %1530
        %vm1540 = vcmask 289984
        %vm1541 = vsmask.f32 3328
        %vm1542 = vmand %vm1540, %vm1541
        %v1543 = vld [vmem:[#allocation3] sm:$0xf]
        %v1544 = vsel %vm1542, %v1517, %v1543
        %1545 = vst [vmem:[#allocation3] sm:$0xf] %v1544
        %v1546 = vld [vmem:[#allocation3 + $0x4] sm:$0xf]
        %v1547 = vsel %vm1542, %v1519, %v1546
        %1548 = vst [vmem:[#allocation3 + $0x4] sm:$0xf] %v1547
        %v1549 = vld [vmem:[#allocation3 + $0x8] sm:$0xf]
        %v1550 = vsel %vm1542, %v1521, %v1549
        %1551 = vst [vmem:[#allocation3 + $0x8] sm:$0xf] %v1550
        %v1552 = vld [vmem:[#allocation3 + $0xc] sm:$0xf]
        %v1553 = vsel %vm1542, %v1523, %v1552
        %1554 = vst [vmem:[#allocation3 + $0xc] sm:$0xf] %v1553
        %v1555 = vld [vmem:[#allocation3 + $0x10] sm:$0xf]
        %v1556 = vsel %vm1542, %v1525, %v1555
        %1557 = vst [vmem:[#allocation3 + $0x10] sm:$0xf] %v1556
        %v1558 = vld [vmem:[#allocation3 + $0x14] sm:$0xf]
        %v1559 = vsel %vm1542, %v1527, %v1558
        %1560 = vst [vmem:[#allocation3 + $0x14] sm:$0xf] %v1559
        %v1561 = vld [vmem:[#allocation3 + $0x18] sm:$0xf]
        %v1562 = vsel %vm1542, %v1529, %v1561
        %1563 = vst [vmem:[#allocation3 + $0x18] sm:$0xf] %v1562
        %v1564 = vld [vmem:[#allocation3 + $0x1c] sm:$0xf]
        %v1565 = vsel %vm1542, %v1531, %v1564
        %1566 = vst [vmem:[#allocation3 + $0x1c] sm:$0xf] %v1565
        %v1567 = vld [vmem:[#allocation3] sm:$0xf]
        %v1568 = vld [vmem:[#allocation3 + $0x4] sm:$0xf]
        %v1569 = vld [vmem:[#allocation3 + $0x8] sm:$0xf]
        %v1570 = vld [vmem:[#allocation3 + $0xc] sm:$0xf]
        %v1571 = vld [vmem:[#allocation3 + $0x10] sm:$0xf]
        %v1572 = vld [vmem:[#allocation3 + $0x14] sm:$0xf]
        %v1573 = vld [vmem:[#allocation3 + $0x18] sm:$0xf]
        %v1574 = vld [vmem:[#allocation3 + $0x1c] sm:$0xf]
        %v1575 = vld [vmem:[%s5] sm:$0xf]
        %v1576 = vld [vmem:[%s5 + $0x4] sm:$0xf]
        %v1577 = vld [vmem:[%s5 + $0x8] sm:$0xf]
        %v1578 = vld [vmem:[%s5 + $0xc] sm:$0xf]
        %v1579 = vld [vmem:[%s5 + $0x10] sm:$0x3]
        %v1580 = vld [vmem:[%s6] sm:$0x1]
        %v1582 = vlaneseq
        %v1583 = vshrl.u32 %v1582, 7
        %v1584 = vsub.s32 0, %v1583
        %v1585 = vrot.slane %v1580, %v1584
        %v1595 = vunpack.c.l.b16 %v1567
        %v1596 = vunpack.c.l.b16 %v1568
        %v1597 = vunpack.c.l.b16 %v1569
        %v1598 = vunpack.c.l.b16 %v1570
        %v1599 = vunpack.c.l.b16 %v1571
        %v1600 = vunpack.c.l.b16 %v1572
        %v1601 = vunpack.c.l.b16 %v1573
        %v1602 = vunpack.c.l.b16 %v1574
        %v1603 = vpack.c.b16 %v1596, %v1595
        %v1604 = vpack.c.b16 %v1598, %v1597
        %v1605 = vpack.c.b16 %v1600, %v1599
        %v1606 = vpack.c.b16 %v1602, %v1601
        %v1612 = vunpack.c.l.b16 %v1575
        %v1613 = vunpack.c.l.b16 %v1576
        %v1614 = vunpack.c.l.b16 %v1577
        %v1615 = vunpack.c.l.b16 %v1578
        %v1616 = vunpack.c.l.b16 %v1579
        %v1617 = vpack.c.b16 %v1613, %v1612
        %v1618 = vpack.c.b16 %v1615, %v1614
        %v1619 = vpack.c.b16 %v1616, %v1616
        %vm1622 = vcmask 293888
        %v1624 = vsel %vm1622, %v1603, 0
        %v1627 = vsel %vm1622, %v1604, 0
        %v1630 = vsel %vm1622, %v1605, 0
        %v1633 = vsel %vm1622, %v1606, 0
        %vm1635 = vcmask 1041408
        %v1637 = vsel %vm1635, %v1619, 0
        %1639 = vmatprep.subr.bf16.mxu0 0
        %1640 = vmatpush1.bf16.msra.mxu0 0
        %1641 = vmatprep.subr.bf16.mxu0 0
        %1642 = vmatpush1.bf16.msra.mxu0 0
        %1643 = vmatprep.subr.bf16.mxu0 0
        %1644 = vmatpush1.bf16.msra.mxu0 0
        %1645 = vmatprep.subr.bf16.mxu0 0
        %1646 = vmatpush1.bf16.msra.mxu0 0
        %1647 = vmatprep.subr.bf16.mxu0 0
        %1648 = vmatpush1.bf16.msra.mxu0 0
        %1649 = vmatprep.subr.bf16.mxu0 0
        %1650 = vmatpush1.bf16.msra.mxu0 %v1637
        %1651 = vmatprep.subr.bf16.mxu0 0
        %1652 = vmatpush1.bf16.msra.mxu0 %v1618
        %1653 = vmatprep.subr.bf16.mxu0 0
        %1654 = vmatpush1.bf16.msra.mxu0 %v1617
        %1655 = vmatprep.subr.bf16.mxu0 0
        %1656 = vmatpush2.bf16.msra.mxu0 0
        %1657 = vmatprep.subr.bf16.mxu0 0
        %1658 = vmatpush2.bf16.msra.mxu0 0
        %1659 = vmatprep.subr.bf16.mxu0 0
        %1660 = vmatpush2.bf16.msra.mxu0 0
        %1661 = vmatprep.subr.bf16.mxu0 0
        %1662 = vmatpush2.bf16.msra.mxu0 0
        %1663 = vmatprep.subr.bf16.mxu0 0
        %1664 = vmatpush2.bf16.msra.mxu0 0
        %1665 = vmatprep.subr.bf16.mxu0 0
        %1666 = vmatpush2.bf16.msra.mxu0 0
        %1667 = vmatprep.subr.bf16.mxu0 0
        %1668 = vmatpush2.bf16.msra.mxu0 0
        %1669 = vmatprep.subr.bf16.mxu0 0
        %1670 = vmatpush2.bf16.msra.mxu0 0
        %1671 = vmatprep.mubr.bf16.mxu0 0
        %1672 = vmatmul.mubr.bf16.gmra.mxu0 %v1624
        %v1673 = vpop.f32.mrf.mxu0
        %v1674 = vadd.f32 %v1585, %v1673
        %v1675 = vpop.f32.mrf.mxu0
        %v1676 = vpop.f32.mrf.mxu0
        %v1677 = vadd.f32 %v1585, %v1676
        %v1678 = vpop.f32.mrf.mxu0
        %1679 = vmatprep.mubr.bf16.mxu0 0
        %1680 = vmatmul.mubr.bf16.gmra.mxu0 %v1627
        %v1681 = vpop.f32.mrf.mxu0
        %v1682 = vadd.f32 %v1585, %v1681
        %v1683 = vpop.f32.mrf.mxu0
        %v1684 = vpop.f32.mrf.mxu0
        %v1685 = vadd.f32 %v1585, %v1684
        %v1686 = vpop.f32.mrf.mxu0
        %1687 = vmatprep.mubr.bf16.mxu0 0
        %1688 = vmatmul.mubr.bf16.gmra.mxu0 %v1630
        %v1689 = vpop.f32.mrf.mxu0
        %v1690 = vadd.f32 %v1585, %v1689
        %v1691 = vpop.f32.mrf.mxu0
        %v1692 = vpop.f32.mrf.mxu0
        %v1693 = vadd.f32 %v1585, %v1692
        %v1694 = vpop.f32.mrf.mxu0
        %1695 = vmatprep.mubr.bf16.mxu0 0
        %1696 = vmatmul.mubr.bf16.gmra.mxu0 %v1633
        %v1697 = vpop.f32.mrf.mxu0
        %v1698 = vadd.f32 %v1585, %v1697
        %v1699 = vpop.f32.mrf.mxu0
        %v1700 = vpop.f32.mrf.mxu0
        %v1701 = vadd.f32 %v1585, %v1700
        %v1702 = vpop.f32.mrf.mxu0
        %1703 = vdwg.mxu0
        %v1704 = vmax.f32 %v1674, 0.0
        %v1705 = vmax.f32 %v1677, 0.0
        %v1706 = vmax.f32 %v1682, 0.0
        %v1707 = vmax.f32 %v1685, 0.0
        %v1708 = vmax.f32 %v1690, 0.0
        %v1709 = vmax.f32 %v1693, 0.0
        %v1710 = vmax.f32 %v1698, 0.0
        %v1711 = vmax.f32 %v1701, 0.0
        %v1712 = vpack.c.bf16 %v1705, %v1704
        %v1713 = vpack.c.bf16 %v1707, %v1706
        %v1714 = vpack.c.bf16 %v1709, %v1708
        %v1715 = vpack.c.bf16 %v1711, %v1710
        %v1716 = vld [vmem:[%s7] sm:$0x3]
        %v1717 = vld [vmem:[%s8] sm:$0x1]
        %v1719 = vlaneseq
        %v1720 = vshrl.u32 %v1719, 7
        %v1721 = vsub.s32 0, %v1720
        %v1722 = vrot.slane %v1717, %v1721
        %v1725 = vsel %vm864, %v1712, 0
        %v1728 = vsel %vm864, %v1713, 0
        %v1731 = vsel %vm864, %v1714, 0
        %v1734 = vsel %vm864, %v1715, 0
        %v1737 = vsel %vm1635, %v1716, 0
        %1739 = vmatprep.subr.bf16.mxu0 0
        %1740 = vmatpush1.bf16.msra.mxu0 0
        %1741 = vmatprep.subr.bf16.mxu0 0
        %1742 = vmatpush1.bf16.msra.mxu0 0
        %1743 = vmatprep.subr.bf16.mxu0 0
        %1744 = vmatpush1.bf16.msra.mxu0 0
        %1745 = vmatprep.subr.bf16.mxu0 0
        %1746 = vmatpush1.bf16.msra.mxu0 0
        %1747 = vmatprep.subr.bf16.mxu0 0
        %1748 = vmatpush1.bf16.msra.mxu0 0
        %1749 = vmatprep.subr.bf16.mxu0 0
        %1750 = vmatpush1.bf16.msra.mxu0 0
        %1751 = vmatprep.subr.bf16.mxu0 0
        %1752 = vmatpush1.bf16.msra.mxu0 0
        %1753 = vmatprep.subr.bf16.mxu0 0
        %1754 = vmatpush1.bf16.msra.mxu0 %v1737
        %1755 = vmatprep.subr.bf16.mxu0 0
        %1756 = vmatpush2.bf16.msra.mxu0 0
        %1757 = vmatprep.subr.bf16.mxu0 0
        %1758 = vmatpush2.bf16.msra.mxu0 0
        %1759 = vmatprep.subr.bf16.mxu0 0
        %1760 = vmatpush2.bf16.msra.mxu0 0
        %1761 = vmatprep.subr.bf16.mxu0 0
        %1762 = vmatpush2.bf16.msra.mxu0 0
        %1763 = vmatprep.subr.bf16.mxu0 0
        %1764 = vmatpush2.bf16.msra.mxu0 0
        %1765 = vmatprep.subr.bf16.mxu0 0
        %1766 = vmatpush2.bf16.msra.mxu0 0
        %1767 = vmatprep.subr.bf16.mxu0 0
        %1768 = vmatpush2.bf16.msra.mxu0 0
        %1769 = vmatprep.subr.bf16.mxu0 0
        %1770 = vmatpush2.bf16.msra.mxu0 0
        %1771 = vmatprep.mubr.bf16.mxu0 0
        %1772 = vmatmul.mubr.bf16.gmra.mxu0 %v1725
        %v1773 = vpop.f32.mrf.mxu0
        %v1774 = vadd.f32 %v1722, %v1773
        %v1775 = vpop.f32.mrf.mxu0
        %v1776 = vpop.f32.mrf.mxu0
        %v1777 = vadd.f32 %v1722, %v1776
        %v1778 = vpop.f32.mrf.mxu0
        %1779 = vmatprep.mubr.bf16.mxu0 0
        %1780 = vmatmul.mubr.bf16.gmra.mxu0 %v1728
        %v1781 = vpop.f32.mrf.mxu0
        %v1782 = vadd.f32 %v1722, %v1781
        %v1783 = vpop.f32.mrf.mxu0
        %v1784 = vpop.f32.mrf.mxu0
        %v1785 = vadd.f32 %v1722, %v1784
        %v1786 = vpop.f32.mrf.mxu0
        %1787 = vmatprep.mubr.bf16.mxu0 0
        %1788 = vmatmul.mubr.bf16.gmra.mxu0 %v1731
        %v1789 = vpop.f32.mrf.mxu0
        %v1790 = vadd.f32 %v1722, %v1789
        %v1791 = vpop.f32.mrf.mxu0
        %v1792 = vpop.f32.mrf.mxu0
        %v1793 = vadd.f32 %v1722, %v1792
        %v1794 = vpop.f32.mrf.mxu0
        %1795 = vmatprep.mubr.bf16.mxu0 0
        %1796 = vmatmul.mubr.bf16.gmra.mxu0 %v1734
        %v1797 = vpop.f32.mrf.mxu0
        %v1798 = vadd.f32 %v1722, %v1797
        %v1799 = vpop.f32.mrf.mxu0
        %v1800 = vpop.f32.mrf.mxu0
        %v1801 = vadd.f32 %v1722, %v1800
        %v1802 = vpop.f32.mrf.mxu0
        %1803 = vdwg.mxu0
        %v1804 = vld [vmem:[%s418] sm:$0xff]
        %v1805 = vld [vmem:[%s418 + $0x8] sm:$0xff]
        %v1806 = vld [vmem:[%s418 + $0x10] sm:$0xff]
        %v1807 = vld [vmem:[%s418 + $0x18] sm:$0xff]
        %v1808 = vld [vmem:[%s418 + $0x20] sm:$0xff]
        %v1809 = vld [vmem:[%s418 + $0x28] sm:$0xff]
        %v1810 = vld [vmem:[%s418 + $0x30] sm:$0xff]
        %v1811 = vld [vmem:[%s418 + $0x38] sm:$0xff]
        %v1812 = vadd.f32 %v1774, %v1804
        %v1813 = vadd.f32 %v1777, %v1805
        %v1814 = vadd.f32 %v1782, %v1806
        %v1815 = vadd.f32 %v1785, %v1807
        %v1816 = vadd.f32 %v1790, %v1808
        %v1817 = vadd.f32 %v1793, %v1809
        %v1818 = vadd.f32 %v1798, %v1810
        %v1819 = vadd.f32 %v1801, %v1811
        %v1820 = vmax.f32 %v1812, 0.0
        %v1821 = vmax.f32 %v1813, 0.0
        %v1822 = vmax.f32 %v1814, 0.0
        %v1823 = vmax.f32 %v1815, 0.0
        %v1824 = vmax.f32 %v1816, 0.0
        %v1825 = vmax.f32 %v1817, 0.0
        %v1826 = vmax.f32 %v1818, 0.0
        %v1827 = vmax.f32 %v1819, 0.0
        %1828 = vst.msk [vmem:[%s471] sm:$0xff] %vm510, %v1820
        %1829 = vst.msk [vmem:[%s471 + $0x8] sm:$0xff] %vm510, %v1821
        %1830 = vst.msk [vmem:[%s471 + $0x10] sm:$0xff] %vm510, %v1822
        %1831 = vst.msk [vmem:[%s471 + $0x18] sm:$0xff] %vm510, %v1823
        %1832 = vst.msk [vmem:[%s471 + $0x20] sm:$0xff] %vm510, %v1824
        %1833 = vst.msk [vmem:[%s471 + $0x28] sm:$0xff] %vm510, %v1825
        %1834 = vst.msk [vmem:[%s471 + $0x30] sm:$0xff] %vm510, %v1826
        %1835 = vst.msk [vmem:[%s471 + $0x38] sm:$0xff] %vm510, %v1827
        %s1836 = sand.u32 %s277, 1
        %s1837 = scalar_lea.sflag [#allocation6], %s1836
        %s1838 = sand.u32 %s277, 1
        %s1839 = smul.addr %s1838, 64
        %s1840 = scalar_lea.vmem [#allocation10], %s1839
        // Predicated region
        $region85: #{tpu_custom_call.1} parent=55 // pred_check
          %p1841 = pneg %p287
        $region86: #{tpu_custom_call.1} parent=55 // pred_check_branch
          %1843 = sbr.rel (%p1841) target = $region88
        $region87: #{tpu_custom_call.1} parent=55 // pred_region
          %s1844 = smul.u32 8, %s34
          %s1846 = ssub.s32 1024, 1024
          %1847 = vsyncadd %s1837, %s1846
          %s1848 = smul.addr %s33, 8
          %s1849 = sadd.s32 %s1844, %s1848
          %s1850 = smul.addr %s1849, 128
          %s1851 = scalar_lea.hbm %s9, %s1850
          %s1852 = sshll.u32 %s1840, 4
          %s1853 = int_to_ptr.vmem [resolvable:$true] %s1852
          %1858 = dma.vmem_to_hbm [thread:$0]  %s1853, 1024, %s1851, %s1837, 128, 128, 8
        $region88: #{tpu_custom_call.1} parent=55 // pred_fallthru
          _
      $region56: #{tpu_custom_call.1} parent=5 // pred_fallthru
        _
      %p1859 = scmp.le.s32.totalorder 2, %s24
      // Predicated region
      $region89: #{tpu_custom_call.1} parent=5 // pred_check
        %p1860 = pneg %p1859
      $region90: #{tpu_custom_call.1} parent=5 // pred_check_branch
        %1862 = sbr.rel (%p1860) target = $region92
      $region91: #{tpu_custom_call.1} parent=5 // pred_region
        %s1863 = ssub.s32 %s24, 2
        // Predicated region
        $region93: #{tpu_custom_call.1} parent=91 // pred_check
          %p1864 = pneg %p293
        $region94: #{tpu_custom_call.1} parent=91 // pred_check_branch
          %1866 = sbr.rel (%p1864) target = $region96
        $region95: #{tpu_custom_call.1} parent=91 // pred_region
          %s1867 = sand.u32 %s278, 1
          %s1868 = scalar_lea.sflag [#allocation6], %s1867
          %s1869 = sand.u32 %s278, 1
          %s1870 = smul.addr %s1869, 64
          %s1871 = scalar_lea.vmem [#allocation10], %s1870
          %1872 = dma.done %s1868, 1024
        $region96: #{tpu_custom_call.1} parent=91 // pred_fallthru
          _
      $region92: #{tpu_custom_call.1} parent=5 // pred_fallthru
        _
    $region6: #{tpu_custom_call.1} parent=1 // loop_footer
      %s28 = sadd.s32 1, %s24
    $region7: #{tpu_custom_call.1} parent=1 // loop_footer_branch
      %23 = sbr.rel target = $region3
    $region8: #{tpu_custom_call.1} parent=1 // loop_exit
      _
    %1873 = vsyncpa [#allocation5], 1
    %s1874 = scalar_lea.sflag [#allocation5], 1
    %1875 = vsyncpa %s1874, 1
    %1876 = vsyncpa [#allocation8], 1
    %s1877 = scalar_lea.sflag [#allocation8], 1
    %1878 = vsyncpa %s1877, 1
    %1879 = vsyncpa [#allocation6], 1
    %s1880 = scalar_lea.sflag [#allocation6], 1
    %1881 = vsyncpa %s1880, 1

</llo_original>
